<compile_context>
chip_gen: v5e
topology: v5e:2x2
jax: 0.10.0
libtpu: 0.0.40
codegen_flags: <defaults>
</compile_context>

<pallas_src>
import functools
import math

import jax
import jax.numpy as jnp
import numpy as np
from jax import lax
from jax.experimental import pallas as pl
from jax.experimental.pallas import tpu as pltpu


# ----------------------------- fused MLP + InfoNCE kernel -----------------------------

def cl_fused_kernel(h1_ref, h2_ref, w1t_ref, b1_ref, w2t_ref, b2_ref,
                    o1_ref, o2_ref, loss_ref, z1_scr, z2_scr,
                    *, temperature, seq_len):
    # h1_ref / h2_ref / o1_ref / o2_ref : (bb*T, H) 2-D activation slabs
    # loss_ref                          : (1, 1, 1) per-grid-step loss
    # z1_scr / z2_scr                   : (bb*T, H) VMEM scratch (normalized rows)
    T = seq_len
    rows, H = h1_ref.shape
    bb = rows // T                      # batch elements in this block (static)
    Tm1 = T - 1
    M = 2 * Tm1                         # rows per InfoNCE embedding
    M2 = 2 * M
    inv_t = 1.0 / temperature
    inv_2m = 1.0 / (2.0 * M)

    # Resident weights / biases (same block every grid step -> DMA'd once).
    w1t = w1t_ref[...]                  # (H, H), pre-transposed in the wrapper
    w2t = w2t_ref[...]
    b1 = b1_ref[...]                    # (1, H)
    b2 = b2_ref[...]

    # ---- MLP, one dot per layer over the whole (bb*T, H) slab ----
    def mlp(x):
        h = jnp.maximum(jnp.dot(x, w1t, preferred_element_type=jnp.float32) + b1, 0.0)
        return jnp.maximum(jnp.dot(h, w2t, preferred_element_type=jnp.float32) + b2, 0.0)

    y1 = mlp(h1_ref[...])               # (bb*T, H)
    y2 = mlp(h2_ref[...])
    o1_ref[...] = y1.astype(o1_ref.dtype)   # one whole-block store each
    o2_ref[...] = y2.astype(o2_ref.dtype)

    # ---- normalize every row ONCE (F.normalize, eps=1e-12) via EUP rsqrt ----
    def normalize(y):
        sq = jnp.sum(y * y, axis=1, keepdims=True)           # (bb*T, 1)
        return y * lax.rsqrt(jnp.maximum(sq, 1e-24))          # == y / max(||y||, 1e-12)

    z1_scr[...] = normalize(y1)
    z2_scr[...] = normalize(y2)

    # Masks shared by every batch element (hoisted out of the loop).
    r = lax.broadcasted_iota(jnp.int32, (M2, M2), 0)
    c = lax.broadcasted_iota(jnp.int32, (M2, M2), 1)
    diag = r == c
    pos = (c == r + M) | (r == c + M)   # positive pairs (k, k+M) and (k+M, k)

    # ---- per-batch-element InfoNCE, reading row windows from VMEM scratch ----
    def infonce_step(ii, acc):
        base = ii * T
        zi1 = z1_scr[pl.ds(base + 1, Tm1), :]   # z(h1)[1:]
        zi2 = z2_scr[pl.ds(base + 1, Tm1), :]   # z(h2)[1:]
        zj1 = z1_scr[pl.ds(base, Tm1), :]       # z(h1)[:-1]
        zj2 = z2_scr[pl.ds(base, Tm1), :]       # z(h2)[:-1]
        Z = jnp.concatenate([zi1, zi2, zj1, zj2], axis=0)     # (2M, H), torch row order

        # cosine-similarity re-normalization (eps=1e-8): row norms from a lane
        # reduce, outer product via rank-1 dot (no transpose), exact reciprocal.
        sq = jnp.sum(Z * Z, axis=1, keepdims=True)            # (2M, 1)
        nrm = jnp.sqrt(sq)
        S_raw = lax.dot_general(Z, Z, (((1,), (1,)), ((), ())),
                                preferred_element_type=jnp.float32)   # (2M, 2M)
        outer = lax.dot_general(nrm, nrm, (((1,), (1,)), ((), ())),
                                preferred_element_type=jnp.float32)   # (2M, 2M)
        S = S_raw * pl.reciprocal(jnp.maximum(outer, 1e-8), approx=False)

        # loss = (1/2M) * [ sum_i log(sum_{m!=i} exp(S[i,m]/T)) - (1/T)*sum_pos S ]
        expS = jnp.exp(S * inv_t)
        row_sums = jnp.sum(jnp.where(diag, 0.0, expS), axis=1, keepdims=True)  # (2M,1)
        log_sum = jnp.sum(jnp.log(row_sums), keepdims=True)                    # (1,1)
        pos_sum = jnp.sum(jnp.where(pos, S, 0.0), keepdims=True)               # (1,1)
        return acc + (log_sum - pos_sum * inv_t) * inv_2m

    acc0 = jnp.zeros((1, 1), jnp.float32)
    if bb <= 8:
        # Small block: static unroll with static scratch slices (best scheduling).
        acc = acc0
        for ii in range(bb):
            acc = infonce_step(ii, acc)
        loss = acc
    else:
        # Large block: bound register live ranges with a rolled loop.
        loss = lax.fori_loop(0, bb, infonce_step, acc0)

    loss_ref[0] = loss                  # single (1,1) write per grid step


# ----------------------------- wrapper -----------------------------

@functools.partial(jax.jit, static_argnames=("temperature", "batch_block"))
def cl_mlp_forward(h1, h2, w1, b1, w2, b2, temperature=0.1, batch_block=None):
    """h1, h2: (T, B, H).  Returns (h1_out (B,T,H), h2_out (B,T,H), scalar cl_loss)."""
    T, B, H = h1.shape

    # Default: whole batch in one grid step (per-step pipeline overhead dominates
    # at small sizes). A user-requested split is only honoured when it keeps the
    # tiled sublane dim (bb*T) 8-aligned (useful for v7x's two TensorCores at
    # larger batches).
    bb = B if batch_block is None else int(batch_block)
    if bb >= B or bb <= 0 or B % bb != 0 or (bb * T) % 8 != 0:
        bb = B
    num_blocks = B // bb

    # Layout prep (cheap XLA ops, done once): (T,B,H) -> (B,T,H) -> (B*T,H) slab,
    # pre-transposed weights for a clean MXU feed, row-vector biases.
    h1p = jnp.transpose(h1, (1, 0, 2)).reshape(B * T, H)
    h2p = jnp.transpose(h2, (1, 0, 2)).reshape(B * T, H)
    w1t = jnp.transpose(w1)
    w2t = jnp.transpose(w2)
    b1r = b1.reshape(1, H)
    b2r = b2.reshape(1, H)

    # VMEM budget: 4 activation slabs (h1,h2,o1,o2) double-buffered + resident
    # weights/biases + 2 scratch slabs + headroom for in-kernel temporaries.
    slab = bb * T * H * 4
    need = 4 * 2 * slab + 2 * (2 * H * H * 4 + 2 * H * 4) + 2 * slab + (4 << 20)
    vmem_limit = int(min(100 << 20, max(16 << 20, 2 * need)))

    kern = functools.partial(cl_fused_kernel, temperature=temperature, seq_len=T)
    h1o2d, h2o2d, losses = pl.pallas_call(
        kern,
        out_shape=(jax.ShapeDtypeStruct((B * T, H), jnp.float32),
                   jax.ShapeDtypeStruct((B * T, H), jnp.float32),
                   jax.ShapeDtypeStruct((num_blocks, 1, 1), jnp.float32)),
        grid_spec=pltpu.PrefetchScalarGridSpec(
            num_scalar_prefetch=0,
            grid=(num_blocks,),
            in_specs=[pl.BlockSpec((bb * T, H), lambda g: (g, 0)),
                      pl.BlockSpec((bb * T, H), lambda g: (g, 0)),
                      pl.BlockSpec((H, H), lambda g: (0, 0)),
                      pl.BlockSpec((1, H), lambda g: (0, 0)),
                      pl.BlockSpec((H, H), lambda g: (0, 0)),
                      pl.BlockSpec((1, H), lambda g: (0, 0))],
            out_specs=[pl.BlockSpec((bb * T, H), lambda g: (g, 0)),
                       pl.BlockSpec((bb * T, H), lambda g: (g, 0)),
                       pl.BlockSpec((1, 1, 1), lambda g: (g, 0, 0))],
            scratch_shapes=[pltpu.VMEM((bb * T, H), jnp.float32),
                            pltpu.VMEM((bb * T, H), jnp.float32)],
        ),
        compiler_params=pltpu.CompilerParams(
            dimension_semantics=("parallel",),
            vmem_limit_bytes=vmem_limit,
        ),
    )(h1p, h2p, w1t, b1r, w2t, b2r)

    h1o = h1o2d.reshape(B, T, H)
    h2o = h2o2d.reshape(B, T, H)
    return h1o, h2o, jnp.sum(losses)


# ----------------------------- pure-JAX reference -----------------------------

def ref_forward(h1, h2, w1, b1, w2, b2, temperature=0.1):
    def P(x):
        x = jnp.maximum(x @ w1.T + b1, 0.0)
        return jnp.maximum(x @ w2.T + b2, 0.0)

    h1p = jnp.transpose(h1, (1, 0, 2))
    h2p = jnp.transpose(h2, (1, 0, 2))
    h1o = P(h1p)
    h2o = P(h2p)
    ht1 = jnp.concatenate([h1o[:, 1:, :], h2o[:, 1:, :]], axis=1)
    ht2 = jnp.concatenate([h1o[:, :-1, :], h2o[:, :-1, :]], axis=1)

    def infonce(ei, ej):
        M = ei.shape[0]
        zi = ei / jnp.maximum(jnp.linalg.norm(ei, axis=1, keepdims=True), 1e-12)
        zj = ej / jnp.maximum(jnp.linalg.norm(ej, axis=1, keepdims=True), 1e-12)
        Z = jnp.concatenate([zi, zj], axis=0)
        zn = jnp.linalg.norm(Z, axis=1, keepdims=True)
        S = (Z @ Z.T) / jnp.maximum(zn * zn.T, 1e-8)
        expS = jnp.exp(S / temperature)
        mask = ~jnp.eye(2 * M, dtype=bool)
        row = jnp.sum(jnp.where(mask, expS, 0.0), axis=1)
        logsum = jnp.sum(jnp.log(row))
        pos = jnp.sum(jnp.diagonal(S[:M, M:])) + jnp.sum(jnp.diagonal(S[M:, :M]))
        return (logsum - pos / temperature) / (2.0 * M)

    cl = 0.0
    for i in range(ht1.shape[0]):
        cl = cl + infonce(ht1[i], ht2[i])
    return h1o, h2o, cl


# ----------------------------- main -----------------------------

if __name__ == "__main__":
    T, B, H = 9, 4, 32   # seq, batch, hidden_dim  (2*(T-1) = 16, 2M = 32)

    key = jax.random.PRNGKey(0)
    ks = jax.random.split(key, 6)
    bound = 1.0 / math.sqrt(H)
    w1 = jax.random.uniform(ks[0], (H, H), jnp.float32, -bound, bound)
    b1 = jax.random.uniform(ks[1], (H,), jnp.float32, -bound, bound)
    w2 = jax.random.uniform(ks[2], (H, H), jnp.float32, -bound, bound)
    b2 = jax.random.uniform(ks[3], (H,), jnp.float32, -bound, bound)
    h1 = jax.random.normal(ks[4], (T, B, H), jnp.float32)
    h2 = jax.random.normal(ks[5], (T, B, H), jnp.float32)

    # Default config: whole batch in one grid step (grid=(1,)), fully fused.
    h1o, h2o, cl_loss = cl_mlp_forward(h1, h2, w1, b1, w2, b2)
    jax.block_until_ready((h1o, h2o, cl_loss))

    r1, r2, rcl = ref_forward(h1, h2, w1, b1, w2, b2)
    np.testing.assert_allclose(np.asarray(h1o), np.asarray(r1), rtol=1e-5, atol=1e-5)
    np.testing.assert_allclose(np.asarray(h2o), np.asarray(r2), rtol=1e-5, atol=1e-5)
    np.testing.assert_allclose(np.asarray(cl_loss), np.asarray(rcl), rtol=1e-3, atol=1e-3)

    print("KERNEL_OK")
</pallas_src>

<mosaic_0001>
module attributes {stable_mosaic.version = 11 : i64} {
  func.func @cl_fused_kernel(%arg0: i32, %arg1: memref<36x32xf32, #tpu.memory_space<vmem>>, %arg2: memref<36x32xf32, #tpu.memory_space<vmem>>, %arg3: memref<32x32xf32, #tpu.memory_space<vmem>>, %arg4: memref<1x32xf32, #tpu.memory_space<vmem>>, %arg5: memref<32x32xf32, #tpu.memory_space<vmem>>, %arg6: memref<1x32xf32, #tpu.memory_space<vmem>>, %arg7: memref<36x32xf32, #tpu.memory_space<vmem>>, %arg8: memref<36x32xf32, #tpu.memory_space<vmem>>, %arg9: memref<1x1x1xf32, #tpu.memory_space<vmem>>, %arg10: memref<36x32xf32, #tpu.memory_space<vmem>>, %arg11: memref<36x32xf32, #tpu.memory_space<vmem>>) attributes {dimension_semantics = [#tpu.dimension_semantics<parallel>], iteration_bounds = array<i64: 1>, scalar_prefetch = 0 : i64, scratch_operands = 2 : i64, tpu.core_type = #tpu.core_type<tc>, window_params = [{transform_indices = @transform_0, window_bounds = array<i64: 36, 32>}, {transform_indices = @transform_1, window_bounds = array<i64: 36, 32>}, {pipeline_mode = #tpu.pipeline_mode<synchronous>, transform_indices = @transform_2, window_bounds = array<i64: 32, 32>}, {pipeline_mode = #tpu.pipeline_mode<synchronous>, transform_indices = @transform_3, window_bounds = array<i64: 1, 32>}, {pipeline_mode = #tpu.pipeline_mode<synchronous>, transform_indices = @transform_4, window_bounds = array<i64: 32, 32>}, {pipeline_mode = #tpu.pipeline_mode<synchronous>, transform_indices = @transform_5, window_bounds = array<i64: 1, 32>}, {transform_indices = @transform_6, window_bounds = array<i64: 36, 32>}, {transform_indices = @transform_7, window_bounds = array<i64: 36, 32>}, {transform_indices = @transform_8, window_bounds = array<i64: 1, 1, 1>}]} {
    %c0 = arith.constant 0 : index
    %c0_0 = arith.constant 0 : index
    %0 = vector.load %arg3[%c0, %c0_0] : memref<32x32xf32, #tpu.memory_space<vmem>>, vector<32x32xf32>
    %c0_1 = arith.constant 0 : index
    %c0_2 = arith.constant 0 : index
    %1 = vector.load %arg5[%c0_1, %c0_2] : memref<32x32xf32, #tpu.memory_space<vmem>>, vector<32x32xf32>
    %c0_3 = arith.constant 0 : index
    %c0_4 = arith.constant 0 : index
    %2 = vector.load %arg4[%c0_3, %c0_4] : memref<1x32xf32, #tpu.memory_space<vmem>>, vector<1x32xf32>
    %c0_5 = arith.constant 0 : index
    %c0_6 = arith.constant 0 : index
    %3 = vector.load %arg6[%c0_5, %c0_6] : memref<1x32xf32, #tpu.memory_space<vmem>>, vector<1x32xf32>
    %c0_7 = arith.constant 0 : index
    %c0_8 = arith.constant 0 : index
    %4 = vector.load %arg1[%c0_7, %c0_8] : memref<36x32xf32, #tpu.memory_space<vmem>>, vector<36x32xf32>
    %cst = arith.constant dense<0.000000e+00> : vector<36x32xf32>
    %5 = tpu.matmul %4, %0, %cst {dimension_numbers = #tpu.dot_dimension_numbers<[1], [0], [0], [1], [0, 0, 1, 1], [], []>} : vector<36x32xf32>, vector<32x32xf32>, vector<36x32xf32> -> vector<36x32xf32>
    %6 = vector.broadcast %2 : vector<1x32xf32> to vector<36x32xf32>
    %7 = arith.addf %5, %6 : vector<36x32xf32>
    %cst_9 = arith.constant 0.000000e+00 : f32
    %8 = vector.broadcast %cst_9 : f32 to vector<36x32xf32>
    %9 = arith.maximumf %7, %8 : vector<36x32xf32>
    %cst_10 = arith.constant dense<0.000000e+00> : vector<36x32xf32>
    %10 = tpu.matmul %9, %1, %cst_10 {dimension_numbers = #tpu.dot_dimension_numbers<[1], [0], [0], [1], [0, 0, 1, 1], [], []>} : vector<36x32xf32>, vector<32x32xf32>, vector<36x32xf32> -> vector<36x32xf32>
    %11 = vector.broadcast %3 : vector<1x32xf32> to vector<36x32xf32>
    %12 = arith.addf %10, %11 : vector<36x32xf32>
    %cst_11 = arith.constant 0.000000e+00 : f32
    %13 = vector.broadcast %cst_11 : f32 to vector<36x32xf32>
    %14 = arith.maximumf %12, %13 : vector<36x32xf32>
    %c0_12 = arith.constant 0 : index
    %c0_13 = arith.constant 0 : index
    %15 = vector.load %arg2[%c0_12, %c0_13] : memref<36x32xf32, #tpu.memory_space<vmem>>, vector<36x32xf32>
    %cst_14 = arith.constant dense<0.000000e+00> : vector<36x32xf32>
    %16 = tpu.matmul %15, %0, %cst_14 {dimension_numbers = #tpu.dot_dimension_numbers<[1], [0], [0], [1], [0, 0, 1, 1], [], []>} : vector<36x32xf32>, vector<32x32xf32>, vector<36x32xf32> -> vector<36x32xf32>
    %17 = vector.broadcast %2 : vector<1x32xf32> to vector<36x32xf32>
    %18 = arith.addf %16, %17 : vector<36x32xf32>
    %cst_15 = arith.constant 0.000000e+00 : f32
    %19 = vector.broadcast %cst_15 : f32 to vector<36x32xf32>
    %20 = arith.maximumf %18, %19 : vector<36x32xf32>
    %cst_16 = arith.constant dense<0.000000e+00> : vector<36x32xf32>
    %21 = tpu.matmul %20, %1, %cst_16 {dimension_numbers = #tpu.dot_dimension_numbers<[1], [0], [0], [1], [0, 0, 1, 1], [], []>} : vector<36x32xf32>, vector<32x32xf32>, vector<36x32xf32> -> vector<36x32xf32>
    %22 = vector.broadcast %3 : vector<1x32xf32> to vector<36x32xf32>
    %23 = arith.addf %21, %22 : vector<36x32xf32>
    %cst_17 = arith.constant 0.000000e+00 : f32
    %24 = vector.broadcast %cst_17 : f32 to vector<36x32xf32>
    %25 = arith.maximumf %23, %24 : vector<36x32xf32>
    %c0_18 = arith.constant 0 : index
    %c0_19 = arith.constant 0 : index
    %26 = vector.load %arg7[%c0_18, %c0_19] : memref<36x32xf32, #tpu.memory_space<vmem>>, vector<36x32xf32>
    tpu.vector_store %arg7[%c0_18, %c0_19], %14 {strides = array<i32>} : memref<36x32xf32, #tpu.memory_space<vmem>>, vector<36x32xf32>,
    %c0_20 = arith.constant 0 : index
    %c0_21 = arith.constant 0 : index
    %27 = vector.load %arg8[%c0_20, %c0_21] : memref<36x32xf32, #tpu.memory_space<vmem>>, vector<36x32xf32>
    tpu.vector_store %arg8[%c0_20, %c0_21], %25 {strides = array<i32>} : memref<36x32xf32, #tpu.memory_space<vmem>>, vector<36x32xf32>,
    %28 = arith.mulf %14, %14 : vector<36x32xf32>
    %cst_22 = arith.constant dense<0.000000e+00> : vector<36xf32>
    %29 = vector.multi_reduction <add>, %28, %cst_22 [1] : vector<36x32xf32> to vector<36xf32>
    %30 = vector.shape_cast %29 : vector<36xf32> to vector<36x1xf32>
    %cst_23 = arith.constant 1.000000e-24 : f32
    %31 = vector.broadcast %cst_23 : f32 to vector<36x1xf32>
    %32 = arith.maximumf %30, %31 : vector<36x1xf32>
    %33 = math.rsqrt %32 : vector<36x1xf32>
    %34 = vector.broadcast %33 : vector<36x1xf32> to vector<36x32xf32>
    %35 = arith.mulf %14, %34 : vector<36x32xf32>
    %c0_24 = arith.constant 0 : index
    %c0_25 = arith.constant 0 : index
    %36 = vector.load %arg10[%c0_24, %c0_25] : memref<36x32xf32, #tpu.memory_space<vmem>>, vector<36x32xf32>
    tpu.vector_store %arg10[%c0_24, %c0_25], %35 {strides = array<i32>} : memref<36x32xf32, #tpu.memory_space<vmem>>, vector<36x32xf32>,
    %37 = arith.mulf %25, %25 : vector<36x32xf32>
    %cst_26 = arith.constant dense<0.000000e+00> : vector<36xf32>
    %38 = vector.multi_reduction <add>, %37, %cst_26 [1] : vector<36x32xf32> to vector<36xf32>
    %39 = vector.shape_cast %38 : vector<36xf32> to vector<36x1xf32>
    %cst_27 = arith.constant 1.000000e-24 : f32
    %40 = vector.broadcast %cst_27 : f32 to vector<36x1xf32>
    %41 = arith.maximumf %39, %40 : vector<36x1xf32>
    %42 = math.rsqrt %41 : vector<36x1xf32>
    %43 = vector.broadcast %42 : vector<36x1xf32> to vector<36x32xf32>
    %44 = arith.mulf %25, %43 : vector<36x32xf32>
    %c0_28 = arith.constant 0 : index
    %c0_29 = arith.constant 0 : index
    %45 = vector.load %arg11[%c0_28, %c0_29] : memref<36x32xf32, #tpu.memory_space<vmem>>, vector<36x32xf32>
    tpu.vector_store %arg11[%c0_28, %c0_29], %44 {strides = array<i32>} : memref<36x32xf32, #tpu.memory_space<vmem>>, vector<36x32xf32>,
    %46 = tpu.iota {dimensions = array<i32: 0>} : vector<32x32xi32>
    %47 = tpu.iota {dimensions = array<i32: 1>} : vector<32x32xi32>
    %48 = arith.cmpi eq, %46, %47 : vector<32x32xi32>
    %c16_i32 = arith.constant 16 : i32
    %49 = vector.broadcast %c16_i32 : i32 to vector<32x32xi32>
    %50 = arith.addi %46, %49 : vector<32x32xi32>
    %51 = arith.cmpi eq, %47, %50 : vector<32x32xi32>
    %c16_i32_30 = arith.constant 16 : i32
    %52 = vector.broadcast %c16_i32_30 : i32 to vector<32x32xi32>
    %53 = arith.addi %47, %52 : vector<32x32xi32>
    %54 = arith.cmpi eq, %46, %53 : vector<32x32xi32>
    %55 = arith.ori %51, %54 : vector<32x32xi1>
    %cst_31 = arith.constant 0.000000e+00 : f32
    %56 = vector.broadcast %cst_31 : f32 to vector<1x1xf32>
    %c1 = arith.constant 1 : index
    %c0_32 = arith.constant 0 : index
    %57 = vector.load %arg10[%c1, %c0_32] : memref<36x32xf32, #tpu.memory_space<vmem>>, vector<8x32xf32>
    %c1_33 = arith.constant 1 : index
    %c0_34 = arith.constant 0 : index
    %58 = vector.load %arg11[%c1_33, %c0_34] : memref<36x32xf32, #tpu.memory_space<vmem>>, vector<8x32xf32>
    %c0_35 = arith.constant 0 : index
    %c0_36 = arith.constant 0 : index
    %59 = vector.load %arg10[%c0_35, %c0_36] : memref<36x32xf32, #tpu.memory_space<vmem>>, vector<8x32xf32>
    %c0_37 = arith.constant 0 : index
    %c0_38 = arith.constant 0 : index
    %60 = vector.load %arg11[%c0_37, %c0_38] : memref<36x32xf32, #tpu.memory_space<vmem>>, vector<8x32xf32>
    %61 = tpu.concatenate %57, %58, %59, %60 in 0 : vector<8x32xf32>, vector<8x32xf32>, vector<8x32xf32>, vector<8x32xf32> -> vector<32x32xf32>
    %62 = arith.mulf %61, %61 : vector<32x32xf32>
    %cst_39 = arith.constant dense<0.000000e+00> : vector<32xf32>
    %63 = vector.multi_reduction <add>, %62, %cst_39 [1] : vector<32x32xf32> to vector<32xf32>
    %64 = vector.shape_cast %63 : vector<32xf32> to vector<32x1xf32>
    %65 = math.sqrt %64 : vector<32x1xf32>
    %cst_40 = arith.constant dense<0.000000e+00> : vector<32x32xf32>
    %66 = tpu.matmul %61, %61, %cst_40 {dimension_numbers = #tpu.dot_dimension_numbers<[1], [1], [0], [0], [0, 0, 1, 0], [], []>} : vector<32x32xf32>, vector<32x32xf32>, vector<32x32xf32> -> vector<32x32xf32>
    %cst_41 = arith.constant dense<0.000000e+00> : vector<32x32xf32>
    %67 = tpu.matmul %65, %65, %cst_41 {dimension_numbers = #tpu.dot_dimension_numbers<[1], [1], [0], [0], [0, 0, 1, 0], [], []>} : vector<32x1xf32>, vector<32x1xf32>, vector<32x32xf32> -> vector<32x32xf32>
    %cst_42 = arith.constant 9.99999993E-9 : f32
    %68 = vector.broadcast %cst_42 : f32 to vector<32x32xf32>
    %69 = arith.maximumf %67, %68 : vector<32x32xf32>
    %70 = tpu.reciprocal %69 : vector<32x32xf32> -> vector<32x32xf32>
    %71 = arith.mulf %66, %70 : vector<32x32xf32>
    %cst_43 = arith.constant 1.000000e+01 : f32
    %72 = vector.broadcast %cst_43 : f32 to vector<32x32xf32>
    %73 = arith.mulf %71, %72 : vector<32x32xf32>
    %74 = math.exp %73 : vector<32x32xf32>
    %cst_44 = arith.constant 0.000000e+00 : f32
    %75 = vector.broadcast %cst_44 : f32 to vector<32x32xf32>
    %76 = arith.select %48, %75, %74 : vector<32x32xi1>, vector<32x32xf32>
    %cst_45 = arith.constant dense<0.000000e+00> : vector<32xf32>
    %77 = vector.multi_reduction <add>, %76, %cst_45 [1] : vector<32x32xf32> to vector<32xf32>
    %78 = vector.shape_cast %77 : vector<32xf32> to vector<32x1xf32>
    %79 = math.log %78 : vector<32x1xf32>
    %80 = vector.shape_cast %79 : vector<32x1xf32> to vector<1x32x1xf32>
    %cst_46 = arith.constant dense<0.000000e+00> : vector<1xf32>
    %81 = vector.multi_reduction <add>, %80, %cst_46 [1, 2] : vector<1x32x1xf32> to vector<1xf32>
    %82 = vector.shape_cast %81 : vector<1xf32> to vector<1x1x1xf32>
    %83 = vector.extract %82[0, 0, 0] : f32 from vector<1x1x1xf32>
    %84 = vector.broadcast %83 : f32 to vector<1x1xf32>
    %cst_47 = arith.constant 0.000000e+00 : f32
    %85 = vector.broadcast %cst_47 : f32 to vector<32x32xf32>
    %86 = arith.select %55, %71, %85 : vector<32x32xi1>, vector<32x32xf32>
    %87 = vector.shape_cast %86 : vector<32x32xf32> to vector<1x32x32xf32>
    %cst_48 = arith.constant dense<0.000000e+00> : vector<1xf32>
    %88 = vector.multi_reduction <add>, %87, %cst_48 [1, 2] : vector<1x32x32xf32> to vector<1xf32>
    %89 = vector.shape_cast %88 : vector<1xf32> to vector<1x1x1xf32>
    %90 = vector.extract %89[0, 0, 0] : f32 from vector<1x1x1xf32>
    %91 = vector.broadcast %90 : f32 to vector<1x1xf32>
    %cst_49 = arith.constant 1.000000e+01 : f32
    %92 = vector.broadcast %cst_49 : f32 to vector<1x1xf32>
    %93 = arith.mulf %91, %92 : vector<1x1xf32>
    %94 = arith.subf %84, %93 : vector<1x1xf32>
    %cst_50 = arith.constant 3.125000e-02 : f32
    %95 = vector.broadcast %cst_50 : f32 to vector<1x1xf32>
    %96 = arith.mulf %94, %95 : vector<1x1xf32>
    %97 = arith.addf %56, %96 : vector<1x1xf32>
    %c10 = arith.constant 10 : index
    %c0_51 = arith.constant 0 : index
    %98 = vector.load %arg10[%c10, %c0_51] : memref<36x32xf32, #tpu.memory_space<vmem>>, vector<8x32xf32>
    %c10_52 = arith.constant 10 : index
    %c0_53 = arith.constant 0 : index
    %99 = vector.load %arg11[%c10_52, %c0_53] : memref<36x32xf32, #tpu.memory_space<vmem>>, vector<8x32xf32>
    %c9 = arith.constant 9 : index
    %c0_54 = arith.constant 0 : index
    %100 = vector.load %arg10[%c9, %c0_54] : memref<36x32xf32, #tpu.memory_space<vmem>>, vector<8x32xf32>
    %c9_55 = arith.constant 9 : index
    %c0_56 = arith.constant 0 : index
    %101 = vector.load %arg11[%c9_55, %c0_56] : memref<36x32xf32, #tpu.memory_space<vmem>>, vector<8x32xf32>
    %102 = tpu.concatenate %98, %99, %100, %101 in 0 : vector<8x32xf32>, vector<8x32xf32>, vector<8x32xf32>, vector<8x32xf32> -> vector<32x32xf32>
    %103 = arith.mulf %102, %102 : vector<32x32xf32>
    %cst_57 = arith.constant dense<0.000000e+00> : vector<32xf32>
    %104 = vector.multi_reduction <add>, %103, %cst_57 [1] : vector<32x32xf32> to vector<32xf32>
    %105 = vector.shape_cast %104 : vector<32xf32> to vector<32x1xf32>
    %106 = math.sqrt %105 : vector<32x1xf32>
    %cst_58 = arith.constant dense<0.000000e+00> : vector<32x32xf32>
    %107 = tpu.matmul %102, %102, %cst_58 {dimension_numbers = #tpu.dot_dimension_numbers<[1], [1], [0], [0], [0, 0, 1, 0], [], []>} : vector<32x32xf32>, vector<32x32xf32>, vector<32x32xf32> -> vector<32x32xf32>
    %cst_59 = arith.constant dense<0.000000e+00> : vector<32x32xf32>
    %108 = tpu.matmul %106, %106, %cst_59 {dimension_numbers = #tpu.dot_dimension_numbers<[1], [1], [0], [0], [0, 0, 1, 0], [], []>} : vector<32x1xf32>, vector<32x1xf32>, vector<32x32xf32> -> vector<32x32xf32>
    %cst_60 = arith.constant 9.99999993E-9 : f32
    %109 = vector.broadcast %cst_60 : f32 to vector<32x32xf32>
    %110 = arith.maximumf %108, %109 : vector<32x32xf32>
    %111 = tpu.reciprocal %110 : vector<32x32xf32> -> vector<32x32xf32>
    %112 = arith.mulf %107, %111 : vector<32x32xf32>
    %cst_61 = arith.constant 1.000000e+01 : f32
    %113 = vector.broadcast %cst_61 : f32 to vector<32x32xf32>
    %114 = arith.mulf %112, %113 : vector<32x32xf32>
    %115 = math.exp %114 : vector<32x32xf32>
    %cst_62 = arith.constant 0.000000e+00 : f32
    %116 = vector.broadcast %cst_62 : f32 to vector<32x32xf32>
    %117 = arith.select %48, %116, %115 : vector<32x32xi1>, vector<32x32xf32>
    %cst_63 = arith.constant dense<0.000000e+00> : vector<32xf32>
    %118 = vector.multi_reduction <add>, %117, %cst_63 [1] : vector<32x32xf32> to vector<32xf32>
    %119 = vector.shape_cast %118 : vector<32xf32> to vector<32x1xf32>
    %120 = math.log %119 : vector<32x1xf32>
    %121 = vector.shape_cast %120 : vector<32x1xf32> to vector<1x32x1xf32>
    %cst_64 = arith.constant dense<0.000000e+00> : vector<1xf32>
    %122 = vector.multi_reduction <add>, %121, %cst_64 [1, 2] : vector<1x32x1xf32> to vector<1xf32>
    %123 = vector.shape_cast %122 : vector<1xf32> to vector<1x1x1xf32>
    %124 = vector.extract %123[0, 0, 0] : f32 from vector<1x1x1xf32>
    %125 = vector.broadcast %124 : f32 to vector<1x1xf32>
    %cst_65 = arith.constant 0.000000e+00 : f32
    %126 = vector.broadcast %cst_65 : f32 to vector<32x32xf32>
    %127 = arith.select %55, %112, %126 : vector<32x32xi1>, vector<32x32xf32>
    %128 = vector.shape_cast %127 : vector<32x32xf32> to vector<1x32x32xf32>
    %cst_66 = arith.constant dense<0.000000e+00> : vector<1xf32>
    %129 = vector.multi_reduction <add>, %128, %cst_66 [1, 2] : vector<1x32x32xf32> to vector<1xf32>
    %130 = vector.shape_cast %129 : vector<1xf32> to vector<1x1x1xf32>
    %131 = vector.extract %130[0, 0, 0] : f32 from vector<1x1x1xf32>
    %132 = vector.broadcast %131 : f32 to vector<1x1xf32>
    %cst_67 = arith.constant 1.000000e+01 : f32
    %133 = vector.broadcast %cst_67 : f32 to vector<1x1xf32>
    %134 = arith.mulf %132, %133 : vector<1x1xf32>
    %135 = arith.subf %125, %134 : vector<1x1xf32>
    %cst_68 = arith.constant 3.125000e-02 : f32
    %136 = vector.broadcast %cst_68 : f32 to vector<1x1xf32>
    %137 = arith.mulf %135, %136 : vector<1x1xf32>
    %138 = arith.addf %97, %137 : vector<1x1xf32>
    %c19 = arith.constant 19 : index
    %c0_69 = arith.constant 0 : index
    %139 = vector.load %arg10[%c19, %c0_69] : memref<36x32xf32, #tpu.memory_space<vmem>>, vector<8x32xf32>
    %c19_70 = arith.constant 19 : index
    %c0_71 = arith.constant 0 : index
    %140 = vector.load %arg11[%c19_70, %c0_71] : memref<36x32xf32, #tpu.memory_space<vmem>>, vector<8x32xf32>
    %c18 = arith.constant 18 : index
    %c0_72 = arith.constant 0 : index
    %141 = vector.load %arg10[%c18, %c0_72] : memref<36x32xf32, #tpu.memory_space<vmem>>, vector<8x32xf32>
    %c18_73 = arith.constant 18 : index
    %c0_74 = arith.constant 0 : index
    %142 = vector.load %arg11[%c18_73, %c0_74] : memref<36x32xf32, #tpu.memory_space<vmem>>, vector<8x32xf32>
    %143 = tpu.concatenate %139, %140, %141, %142 in 0 : vector<8x32xf32>, vector<8x32xf32>, vector<8x32xf32>, vector<8x32xf32> -> vector<32x32xf32>
    %144 = arith.mulf %143, %143 : vector<32x32xf32>
    %cst_75 = arith.constant dense<0.000000e+00> : vector<32xf32>
    %145 = vector.multi_reduction <add>, %144, %cst_75 [1] : vector<32x32xf32> to vector<32xf32>
    %146 = vector.shape_cast %145 : vector<32xf32> to vector<32x1xf32>
    %147 = math.sqrt %146 : vector<32x1xf32>
    %cst_76 = arith.constant dense<0.000000e+00> : vector<32x32xf32>
    %148 = tpu.matmul %143, %143, %cst_76 {dimension_numbers = #tpu.dot_dimension_numbers<[1], [1], [0], [0], [0, 0, 1, 0], [], []>} : vector<32x32xf32>, vector<32x32xf32>, vector<32x32xf32> -> vector<32x32xf32>
    %cst_77 = arith.constant dense<0.000000e+00> : vector<32x32xf32>
    %149 = tpu.matmul %147, %147, %cst_77 {dimension_numbers = #tpu.dot_dimension_numbers<[1], [1], [0], [0], [0, 0, 1, 0], [], []>} : vector<32x1xf32>, vector<32x1xf32>, vector<32x32xf32> -> vector<32x32xf32>
    %cst_78 = arith.constant 9.99999993E-9 : f32
    %150 = vector.broadcast %cst_78 : f32 to vector<32x32xf32>
    %151 = arith.maximumf %149, %150 : vector<32x32xf32>
    %152 = tpu.reciprocal %151 : vector<32x32xf32> -> vector<32x32xf32>
    %153 = arith.mulf %148, %152 : vector<32x32xf32>
    %cst_79 = arith.constant 1.000000e+01 : f32
    %154 = vector.broadcast %cst_79 : f32 to vector<32x32xf32>
    %155 = arith.mulf %153, %154 : vector<32x32xf32>
    %156 = math.exp %155 : vector<32x32xf32>
    %cst_80 = arith.constant 0.000000e+00 : f32
    %157 = vector.broadcast %cst_80 : f32 to vector<32x32xf32>
    %158 = arith.select %48, %157, %156 : vector<32x32xi1>, vector<32x32xf32>
    %cst_81 = arith.constant dense<0.000000e+00> : vector<32xf32>
    %159 = vector.multi_reduction <add>, %158, %cst_81 [1] : vector<32x32xf32> to vector<32xf32>
    %160 = vector.shape_cast %159 : vector<32xf32> to vector<32x1xf32>
    %161 = math.log %160 : vector<32x1xf32>
    %162 = vector.shape_cast %161 : vector<32x1xf32> to vector<1x32x1xf32>
    %cst_82 = arith.constant dense<0.000000e+00> : vector<1xf32>
    %163 = vector.multi_reduction <add>, %162, %cst_82 [1, 2] : vector<1x32x1xf32> to vector<1xf32>
    %164 = vector.shape_cast %163 : vector<1xf32> to vector<1x1x1xf32>
    %165 = vector.extract %164[0, 0, 0] : f32 from vector<1x1x1xf32>
    %166 = vector.broadcast %165 : f32 to vector<1x1xf32>
    %cst_83 = arith.constant 0.000000e+00 : f32
    %167 = vector.broadcast %cst_83 : f32 to vector<32x32xf32>
    %168 = arith.select %55, %153, %167 : vector<32x32xi1>, vector<32x32xf32>
    %169 = vector.shape_cast %168 : vector<32x32xf32> to vector<1x32x32xf32>
    %cst_84 = arith.constant dense<0.000000e+00> : vector<1xf32>
    %170 = vector.multi_reduction <add>, %169, %cst_84 [1, 2] : vector<1x32x32xf32> to vector<1xf32>
    %171 = vector.shape_cast %170 : vector<1xf32> to vector<1x1x1xf32>
    %172 = vector.extract %171[0, 0, 0] : f32 from vector<1x1x1xf32>
    %173 = vector.broadcast %172 : f32 to vector<1x1xf32>
    %cst_85 = arith.constant 1.000000e+01 : f32
    %174 = vector.broadcast %cst_85 : f32 to vector<1x1xf32>
    %175 = arith.mulf %173, %174 : vector<1x1xf32>
    %176 = arith.subf %166, %175 : vector<1x1xf32>
    %cst_86 = arith.constant 3.125000e-02 : f32
    %177 = vector.broadcast %cst_86 : f32 to vector<1x1xf32>
    %178 = arith.mulf %176, %177 : vector<1x1xf32>
    %179 = arith.addf %138, %178 : vector<1x1xf32>
    %c28 = arith.constant 28 : index
    %c0_87 = arith.constant 0 : index
    %180 = vector.load %arg10[%c28, %c0_87] : memref<36x32xf32, #tpu.memory_space<vmem>>, vector<8x32xf32>
    %c28_88 = arith.constant 28 : index
    %c0_89 = arith.constant 0 : index
    %181 = vector.load %arg11[%c28_88, %c0_89] : memref<36x32xf32, #tpu.memory_space<vmem>>, vector<8x32xf32>
    %c27 = arith.constant 27 : index
    %c0_90 = arith.constant 0 : index
    %182 = vector.load %arg10[%c27, %c0_90] : memref<36x32xf32, #tpu.memory_space<vmem>>, vector<8x32xf32>
    %c27_91 = arith.constant 27 : index
    %c0_92 = arith.constant 0 : index
    %183 = vector.load %arg11[%c27_91, %c0_92] : memref<36x32xf32, #tpu.memory_space<vmem>>, vector<8x32xf32>
    %184 = tpu.concatenate %180, %181, %182, %183 in 0 : vector<8x32xf32>, vector<8x32xf32>, vector<8x32xf32>, vector<8x32xf32> -> vector<32x32xf32>
    %185 = arith.mulf %184, %184 : vector<32x32xf32>
    %cst_93 = arith.constant dense<0.000000e+00> : vector<32xf32>
    %186 = vector.multi_reduction <add>, %185, %cst_93 [1] : vector<32x32xf32> to vector<32xf32>
    %187 = vector.shape_cast %186 : vector<32xf32> to vector<32x1xf32>
    %188 = math.sqrt %187 : vector<32x1xf32>
    %cst_94 = arith.constant dense<0.000000e+00> : vector<32x32xf32>
    %189 = tpu.matmul %184, %184, %cst_94 {dimension_numbers = #tpu.dot_dimension_numbers<[1], [1], [0], [0], [0, 0, 1, 0], [], []>} : vector<32x32xf32>, vector<32x32xf32>, vector<32x32xf32> -> vector<32x32xf32>
    %cst_95 = arith.constant dense<0.000000e+00> : vector<32x32xf32>
    %190 = tpu.matmul %188, %188, %cst_95 {dimension_numbers = #tpu.dot_dimension_numbers<[1], [1], [0], [0], [0, 0, 1, 0], [], []>} : vector<32x1xf32>, vector<32x1xf32>, vector<32x32xf32> -> vector<32x32xf32>
    %cst_96 = arith.constant 9.99999993E-9 : f32
    %191 = vector.broadcast %cst_96 : f32 to vector<32x32xf32>
    %192 = arith.maximumf %190, %191 : vector<32x32xf32>
    %193 = tpu.reciprocal %192 : vector<32x32xf32> -> vector<32x32xf32>
    %194 = arith.mulf %189, %193 : vector<32x32xf32>
    %cst_97 = arith.constant 1.000000e+01 : f32
    %195 = vector.broadcast %cst_97 : f32 to vector<32x32xf32>
    %196 = arith.mulf %194, %195 : vector<32x32xf32>
    %197 = math.exp %196 : vector<32x32xf32>
    %cst_98 = arith.constant 0.000000e+00 : f32
    %198 = vector.broadcast %cst_98 : f32 to vector<32x32xf32>
    %199 = arith.select %48, %198, %197 : vector<32x32xi1>, vector<32x32xf32>
    %cst_99 = arith.constant dense<0.000000e+00> : vector<32xf32>
    %200 = vector.multi_reduction <add>, %199, %cst_99 [1] : vector<32x32xf32> to vector<32xf32>
    %201 = vector.shape_cast %200 : vector<32xf32> to vector<32x1xf32>
    %202 = math.log %201 : vector<32x1xf32>
    %203 = vector.shape_cast %202 : vector<32x1xf32> to vector<1x32x1xf32>
    %cst_100 = arith.constant dense<0.000000e+00> : vector<1xf32>
    %204 = vector.multi_reduction <add>, %203, %cst_100 [1, 2] : vector<1x32x1xf32> to vector<1xf32>
    %205 = vector.shape_cast %204 : vector<1xf32> to vector<1x1x1xf32>
    %206 = vector.extract %205[0, 0, 0] : f32 from vector<1x1x1xf32>
    %207 = vector.broadcast %206 : f32 to vector<1x1xf32>
    %cst_101 = arith.constant 0.000000e+00 : f32
    %208 = vector.broadcast %cst_101 : f32 to vector<32x32xf32>
    %209 = arith.select %55, %194, %208 : vector<32x32xi1>, vector<32x32xf32>
    %210 = vector.shape_cast %209 : vector<32x32xf32> to vector<1x32x32xf32>
    %cst_102 = arith.constant dense<0.000000e+00> : vector<1xf32>
    %211 = vector.multi_reduction <add>, %210, %cst_102 [1, 2] : vector<1x32x32xf32> to vector<1xf32>
    %212 = vector.shape_cast %211 : vector<1xf32> to vector<1x1x1xf32>
    %213 = vector.extract %212[0, 0, 0] : f32 from vector<1x1x1xf32>
    %214 = vector.broadcast %213 : f32 to vector<1x1xf32>
    %cst_103 = arith.constant 1.000000e+01 : f32
    %215 = vector.broadcast %cst_103 : f32 to vector<1x1xf32>
    %216 = arith.mulf %214, %215 : vector<1x1xf32>
    %217 = arith.subf %207, %216 : vector<1x1xf32>
    %cst_104 = arith.constant 3.125000e-02 : f32
    %218 = vector.broadcast %cst_104 : f32 to vector<1x1xf32>
    %219 = arith.mulf %217, %218 : vector<1x1xf32>
    %220 = arith.addf %179, %219 : vector<1x1xf32>
    %c0_105 = arith.constant 0 : index
    %c0_106 = arith.constant 0 : index
    %c0_107 = arith.constant 0 : index
    %221 = vector.load %arg9[%c0_105, %c0_106, %c0_107] : memref<1x1x1xf32, #tpu.memory_space<vmem>>, vector<1x1x1xf32>
    %222 = vector.shape_cast %221 : vector<1x1x1xf32> to vector<1x1xf32>
    %223 = vector.shape_cast %220 : vector<1x1xf32> to vector<1x1x1xf32>
    tpu.vector_store %arg9[%c0_105, %c0_106, %c0_107], %223 {strides = array<i32>} : memref<1x1x1xf32, #tpu.memory_space<vmem>>, vector<1x1x1xf32>,
    return
  }
  func.func @transform_0(%arg0: i32) -> (i32, i32) {
    %c0_i32 = arith.constant 0 : i32
    %c0_i32_0 = arith.constant 0 : i32
    return %arg0, %c0_i32 : i32, i32
  }
  func.func @transform_1(%arg0: i32) -> (i32, i32) {
    %c0_i32 = arith.constant 0 : i32
    %c0_i32_0 = arith.constant 0 : i32
    return %arg0, %c0_i32 : i32, i32
  }
  func.func @transform_2(%arg0: i32) -> (i32, i32) {
    %c0_i32 = arith.constant 0 : i32
    %c0_i32_0 = arith.constant 0 : i32
    %c0_i32_1 = arith.constant 0 : i32
    return %c0_i32, %c0_i32_0 : i32, i32
  }
  func.func @transform_3(%arg0: i32) -> (i32, i32) {
    %c0_i32 = arith.constant 0 : i32
    %c0_i32_0 = arith.constant 0 : i32
    %c0_i32_1 = arith.constant 0 : i32
    return %c0_i32, %c0_i32_0 : i32, i32
  }
  func.func @transform_4(%arg0: i32) -> (i32, i32) {
    %c0_i32 = arith.constant 0 : i32
    %c0_i32_0 = arith.constant 0 : i32
    %c0_i32_1 = arith.constant 0 : i32
    return %c0_i32, %c0_i32_0 : i32, i32
  }
  func.func @transform_5(%arg0: i32) -> (i32, i32) {
    %c0_i32 = arith.constant 0 : i32
    %c0_i32_0 = arith.constant 0 : i32
    %c0_i32_1 = arith.constant 0 : i32
    return %c0_i32, %c0_i32_0 : i32, i32
  }
  func.func @transform_6(%arg0: i32) -> (i32, i32) {
    %c0_i32 = arith.constant 0 : i32
    %c0_i32_0 = arith.constant 0 : i32
    return %arg0, %c0_i32 : i32, i32
  }
  func.func @transform_7(%arg0: i32) -> (i32, i32) {
    %c0_i32 = arith.constant 0 : i32
    %c0_i32_0 = arith.constant 0 : i32
    return %arg0, %c0_i32 : i32, i32
  }
  func.func @transform_8(%arg0: i32) -> (i32, i32, i32) {
    %c0_i32 = arith.constant 0 : i32
    %c0_i32_0 = arith.constant 0 : i32
    %c0_i32_1 = arith.constant 0 : i32
    return %arg0, %c0_i32, %c0_i32_0 : i32, i32, i32
  }
}

</mosaic_0001>

<llo_original>
// kernel: cl_mlp_forward.1
$region0: #{cl_mlp_forward.1}
  #allocation0 [shape = 'u32[]', space=smem, size = 0x4, offset = 0x4, fixed_abs, tag = 'smem constant byte address 0x4 - core index']
  #allocation1 [shape = 'u32[72,128]{1,0:T(1,128)}', space=vmem, size = 0x9000, scoped, tag = 'internal scratch']
  #allocation2 [shape = 'f32[36,32]{1,0:T(8,128)}', space=vmem, size = 0x5000, scoped, tag = 'scratch operand']
  #allocation3 [shape = 'f32[36,32]{1,0:T(8,128)}', space=vmem, size = 0x5000, scoped, tag = 'scratch operand']
  %s0 = inlined_call_operand.vmem [shape: f32[36,32], index: 0, kind: input, shape index: {}]
  %s1 = inlined_call_operand.vmem [shape: f32[36,32], index: 1, kind: input, shape index: {}]
  %s2 = inlined_call_operand.vmem [shape: f32[32,32], index: 2, kind: input, shape index: {}]
  %s3 = inlined_call_operand.vmem [shape: f32[1,32], index: 3, kind: input, shape index: {}]
  %s4 = inlined_call_operand.vmem [shape: f32[32,32], index: 4, kind: input, shape index: {}]
  %s5 = inlined_call_operand.vmem [shape: f32[1,32], index: 5, kind: input, shape index: {}]
  %s6 = inlined_call_operand.vmem [shape: f32[36,32], index: 6, kind: output, shape index: {0}]
  %s7 = inlined_call_operand.vmem [shape: f32[36,32], index: 7, kind: output, shape index: {1}]
  %s8 = inlined_call_operand.hbm [shape: f32[1,1,1], index: 8, kind: output, shape index: {2}]
  %9 = xla_tuple %s6, %s7, %s8
  %s10 = sld [smem:[#allocation0]]
  $region50: #{cl_mlp_forward.1} parent=0
    _
  %s12 = ssub.s32 1, %s10
  %s13 = scalar_select 0, %s12, %s10
  $region1: #{cl_mlp_forward.1} parent=0
    #allocation4 [shape = 'u8[512]{0}', space=vmem, size = 0x400, scoped, tag = 'output window, operand 2, single buffered']
    #allocation5 [shape = 's32[1]{0}', space=sflag, size = 0x4, scoped, tag = 'scoped memory for cl_mlp_forward.1']
    %14 = vsyncpa [#allocation5], 0
    // Predicated region
    $region2: #{cl_mlp_forward.1} parent=1 // pred_check
      _
    $region3: #{cl_mlp_forward.1} parent=1 // pred_check_branch
      %16 = sbr.rel (0) target = $region5
    $region4: #{cl_mlp_forward.1} parent=1 // pred_region
      _
    $region5: #{cl_mlp_forward.1} parent=1 // pred_fallthru
      _
    // Predicated region
    $region6: #{cl_mlp_forward.1} parent=1 // pred_check
      _
    $region7: #{cl_mlp_forward.1} parent=1 // pred_check_branch
      %18 = sbr.rel (0) target = $region9
    $region8: #{cl_mlp_forward.1} parent=1 // pred_region
      _
    $region9: #{cl_mlp_forward.1} parent=1 // pred_fallthru
      _
    // Predicated region
    $region10: #{cl_mlp_forward.1} parent=1 // pred_check
      _
    $region11: #{cl_mlp_forward.1} parent=1 // pred_check_branch
      %20 = sbr.rel (0) target = $region13
    $region12: #{cl_mlp_forward.1} parent=1 // pred_region
      _
    $region13: #{cl_mlp_forward.1} parent=1 // pred_fallthru
      _
    // Predicated region
    $region14: #{cl_mlp_forward.1} parent=1 // pred_check
      _
    $region15: #{cl_mlp_forward.1} parent=1 // pred_check_branch
      %22 = sbr.rel (0) target = $region17
    $region16: #{cl_mlp_forward.1} parent=1 // pred_region
      _
    $region17: #{cl_mlp_forward.1} parent=1 // pred_fallthru
      _
    // Predicated region
    $region18: #{cl_mlp_forward.1} parent=1 // pred_check
      _
    $region19: #{cl_mlp_forward.1} parent=1 // pred_check_branch
      %24 = sbr.rel (0) target = $region21
    $region20: #{cl_mlp_forward.1} parent=1 // pred_region
      _
    $region21: #{cl_mlp_forward.1} parent=1 // pred_fallthru
      _
    // Predicated region
    $region22: #{cl_mlp_forward.1} parent=1 // pred_check
      _
    $region23: #{cl_mlp_forward.1} parent=1 // pred_check_branch
      %26 = sbr.rel (0) target = $region25
    $region24: #{cl_mlp_forward.1} parent=1 // pred_region
      _
    $region25: #{cl_mlp_forward.1} parent=1 // pred_fallthru
      _
    %v27 = vld [vmem:[%s2] sm:$0xff]
    %v28 = vld [vmem:[%s2 + $0x8] sm:$0xff]
    %v29 = vld [vmem:[%s2 + $0x10] sm:$0xff]
    %v30 = vld [vmem:[%s2 + $0x18] sm:$0xff]
    %v31 = vld [vmem:[%s4] sm:$0xff]
    %v32 = vld [vmem:[%s4 + $0x8] sm:$0xff]
    %v33 = vld [vmem:[%s4 + $0x10] sm:$0xff]
    %v34 = vld [vmem:[%s4 + $0x18] sm:$0xff]
    %v35 = vld [vmem:[%s3] sm:$0x1]
    %v36 = vld [vmem:[%s5] sm:$0x1]
    %v37 = vld [vmem:[%s0] sm:$0xff]
    %v38 = vld [vmem:[%s0 + $0x8] sm:$0xff]
    %v39 = vld [vmem:[%s0 + $0x10] sm:$0xff]
    %v40 = vld [vmem:[%s0 + $0x18] sm:$0xff]
    %v41 = vld [vmem:[%s0 + $0x20] sm:$0xf]
    %v43 = vperm.slane %v35, 0
    %vm45 = vcmask 261120
    %v47 = vsel %vm45, %v37, 0
    %v50 = vsel %vm45, %v38, 0
    %v53 = vsel %vm45, %v39, 0
    %v56 = vsel %vm45, %v40, 0
    %v59 = vsel %vm45, %v41, 0
    %61 = vmatpush.msra.mxu0 0.0
    %62 = vmatpush.msra.mxu0 0.0
    %63 = vmatpush.msra.mxu0 0.0
    %64 = vmatpush.msra.mxu0 0.0
    %65 = vmatpush.msra.mxu0 0.0
    %66 = vmatpush.msra.mxu0 0.0
    %67 = vmatpush.msra.mxu0 0.0
    %68 = vmatpush.msra.mxu0 0.0
    %69 = vmatpush.msra.mxu0 0.0
    %70 = vmatpush.msra.mxu0 0.0
    %71 = vmatpush.msra.mxu0 0.0
    %72 = vmatpush.msra.mxu0 0.0
    %73 = vmatpush.msra.mxu0 %v30
    %74 = vmatpush.msra.mxu0 %v29
    %75 = vmatpush.msra.mxu0 %v28
    %76 = vmatpush.msra.mxu0 %v27
    %77 = vmatmul.f32.gmra.mxu0 %v47
    %v78 = vpop.f32.mrf.mxu0
    %v79 = vadd.f32 %v43, %v78
    %80 = vmatmul.f32.gmra.mxu0 %v50
    %v81 = vpop.f32.mrf.mxu0
    %v82 = vadd.f32 %v43, %v81
    %83 = vmatmul.f32.gmra.mxu0 %v53
    %v84 = vpop.f32.mrf.mxu0
    %v85 = vadd.f32 %v43, %v84
    %86 = vmatmul.f32.gmra.mxu0 %v56
    %v87 = vpop.f32.mrf.mxu0
    %v88 = vadd.f32 %v43, %v87
    %89 = vmatmul.f32.gmra.mxu0 %v59
    %v90 = vpop.f32.mrf.mxu0
    %v91 = vadd.f32 %v43, %v90
    %92 = vdwg.mxu0
    %v93 = vmax.f32 %v79, 0.0
    %v94 = vmax.f32 %v82, 0.0
    %v95 = vmax.f32 %v85, 0.0
    %v96 = vmax.f32 %v88, 0.0
    %v97 = vmax.f32 %v91, 0.0
    %v99 = vperm.slane %v36, 0
    %v102 = vsel %vm45, %v93, 0
    %v105 = vsel %vm45, %v94, 0
    %v108 = vsel %vm45, %v95, 0
    %v111 = vsel %vm45, %v96, 0
    %v114 = vsel %vm45, %v97, 0
    %116 = vmatpush.msra.mxu0 0.0
    %117 = vmatpush.msra.mxu0 0.0
    %118 = vmatpush.msra.mxu0 0.0
    %119 = vmatpush.msra.mxu0 0.0
    %120 = vmatpush.msra.mxu0 0.0
    %121 = vmatpush.msra.mxu0 0.0
    %122 = vmatpush.msra.mxu0 0.0
    %123 = vmatpush.msra.mxu0 0.0
    %124 = vmatpush.msra.mxu0 0.0
    %125 = vmatpush.msra.mxu0 0.0
    %126 = vmatpush.msra.mxu0 0.0
    %127 = vmatpush.msra.mxu0 0.0
    %128 = vmatpush.msra.mxu0 %v34
    %129 = vmatpush.msra.mxu0 %v33
    %130 = vmatpush.msra.mxu0 %v32
    %131 = vmatpush.msra.mxu0 %v31
    %132 = vmatmul.f32.gmra.mxu0 %v102
    %v133 = vpop.f32.mrf.mxu0
    %v134 = vadd.f32 %v99, %v133
    %135 = vmatmul.f32.gmra.mxu0 %v105
    %v136 = vpop.f32.mrf.mxu0
    %v137 = vadd.f32 %v99, %v136
    %138 = vmatmul.f32.gmra.mxu0 %v108
    %v139 = vpop.f32.mrf.mxu0
    %v140 = vadd.f32 %v99, %v139
    %141 = vmatmul.f32.gmra.mxu0 %v111
    %v142 = vpop.f32.mrf.mxu0
    %v143 = vadd.f32 %v99, %v142
    %144 = vmatmul.f32.gmra.mxu0 %v114
    %v145 = vpop.f32.mrf.mxu0
    %v146 = vadd.f32 %v99, %v145
    %147 = vdwg.mxu0
    %v148 = vmax.f32 %v134, 0.0
    %v149 = vmax.f32 %v137, 0.0
    %v150 = vmax.f32 %v140, 0.0
    %v151 = vmax.f32 %v143, 0.0
    %v152 = vmax.f32 %v146, 0.0
    %v153 = vld [vmem:[%s1] sm:$0xff]
    %v154 = vld [vmem:[%s1 + $0x8] sm:$0xff]
    %v155 = vld [vmem:[%s1 + $0x10] sm:$0xff]
    %v156 = vld [vmem:[%s1 + $0x18] sm:$0xff]
    %v157 = vld [vmem:[%s1 + $0x20] sm:$0xf]
    %v159 = vsel %vm45, %v153, 0
    %v162 = vsel %vm45, %v154, 0
    %v165 = vsel %vm45, %v155, 0
    %v168 = vsel %vm45, %v156, 0
    %v171 = vsel %vm45, %v157, 0
    %173 = vmatpush.msra.mxu0 0.0
    %174 = vmatpush.msra.mxu0 0.0
    %175 = vmatpush.msra.mxu0 0.0
    %176 = vmatpush.msra.mxu0 0.0
    %177 = vmatpush.msra.mxu0 0.0
    %178 = vmatpush.msra.mxu0 0.0
    %179 = vmatpush.msra.mxu0 0.0
    %180 = vmatpush.msra.mxu0 0.0
    %181 = vmatpush.msra.mxu0 0.0
    %182 = vmatpush.msra.mxu0 0.0
    %183 = vmatpush.msra.mxu0 0.0
    %184 = vmatpush.msra.mxu0 0.0
    %185 = vmatpush.msra.mxu0 %v30
    %186 = vmatpush.msra.mxu0 %v29
    %187 = vmatpush.msra.mxu0 %v28
    %188 = vmatpush.msra.mxu0 %v27
    %189 = vmatmul.f32.gmra.mxu0 %v159
    %v190 = vpop.f32.mrf.mxu0
    %v191 = vadd.f32 %v43, %v190
    %192 = vmatmul.f32.gmra.mxu0 %v162
    %v193 = vpop.f32.mrf.mxu0
    %v194 = vadd.f32 %v43, %v193
    %195 = vmatmul.f32.gmra.mxu0 %v165
    %v196 = vpop.f32.mrf.mxu0
    %v197 = vadd.f32 %v43, %v196
    %198 = vmatmul.f32.gmra.mxu0 %v168
    %v199 = vpop.f32.mrf.mxu0
    %v200 = vadd.f32 %v43, %v199
    %201 = vmatmul.f32.gmra.mxu0 %v171
    %v202 = vpop.f32.mrf.mxu0
    %v203 = vadd.f32 %v43, %v202
    %204 = vdwg.mxu0
    %v205 = vmax.f32 %v191, 0.0
    %v206 = vmax.f32 %v194, 0.0
    %v207 = vmax.f32 %v197, 0.0
    %v208 = vmax.f32 %v200, 0.0
    %v209 = vmax.f32 %v203, 0.0
    %v211 = vsel %vm45, %v205, 0
    %v214 = vsel %vm45, %v206, 0
    %v217 = vsel %vm45, %v207, 0
    %v220 = vsel %vm45, %v208, 0
    %v223 = vsel %vm45, %v209, 0
    %225 = vmatpush.msra.mxu0 0.0
    %226 = vmatpush.msra.mxu0 0.0
    %227 = vmatpush.msra.mxu0 0.0
    %228 = vmatpush.msra.mxu0 0.0
    %229 = vmatpush.msra.mxu0 0.0
    %230 = vmatpush.msra.mxu0 0.0
    %231 = vmatpush.msra.mxu0 0.0
    %232 = vmatpush.msra.mxu0 0.0
    %233 = vmatpush.msra.mxu0 0.0
    %234 = vmatpush.msra.mxu0 0.0
    %235 = vmatpush.msra.mxu0 0.0
    %236 = vmatpush.msra.mxu0 0.0
    %237 = vmatpush.msra.mxu0 %v34
    %238 = vmatpush.msra.mxu0 %v33
    %239 = vmatpush.msra.mxu0 %v32
    %240 = vmatpush.msra.mxu0 %v31
    %241 = vmatmul.f32.gmra.mxu0 %v211
    %v242 = vpop.f32.mrf.mxu0
    %v243 = vadd.f32 %v99, %v242
    %244 = vmatmul.f32.gmra.mxu0 %v214
    %v245 = vpop.f32.mrf.mxu0
    %v246 = vadd.f32 %v99, %v245
    %247 = vmatmul.f32.gmra.mxu0 %v217
    %v248 = vpop.f32.mrf.mxu0
    %v249 = vadd.f32 %v99, %v248
    %250 = vmatmul.f32.gmra.mxu0 %v220
    %v251 = vpop.f32.mrf.mxu0
    %v252 = vadd.f32 %v99, %v251
    %253 = vmatmul.f32.gmra.mxu0 %v223
    %v254 = vpop.f32.mrf.mxu0
    %v255 = vadd.f32 %v99, %v254
    %256 = vdwg.mxu0
    %v257 = vmax.f32 %v243, 0.0
    %v258 = vmax.f32 %v246, 0.0
    %v259 = vmax.f32 %v249, 0.0
    %v260 = vmax.f32 %v252, 0.0
    %v261 = vmax.f32 %v255, 0.0
    %262 = vst.msk [vmem:[%s6] sm:$0xff] %vm45, %v148
    %263 = vst.msk [vmem:[%s6 + $0x8] sm:$0xff] %vm45, %v149
    %264 = vst.msk [vmem:[%s6 + $0x10] sm:$0xff] %vm45, %v150
    %265 = vst.msk [vmem:[%s6 + $0x18] sm:$0xff] %vm45, %v151
    %vm266 = vcmask 257024
    %267 = vst.msk [vmem:[%s6 + $0x20] sm:$0xf] %vm266, %v152
    %268 = vst.msk [vmem:[%s7] sm:$0xff] %vm45, %v257
    %269 = vst.msk [vmem:[%s7 + $0x8] sm:$0xff] %vm45, %v258
    %270 = vst.msk [vmem:[%s7 + $0x10] sm:$0xff] %vm45, %v259
    %271 = vst.msk [vmem:[%s7 + $0x18] sm:$0xff] %vm45, %v260
    %272 = vst.msk [vmem:[%s7 + $0x20] sm:$0xf] %vm266, %v261
    %v273 = vmul.f32 %v148, %v148
    %v274 = vmul.f32 %v149, %v149
    %v275 = vmul.f32 %v150, %v150
    %v276 = vmul.f32 %v151, %v151
    %v277 = vmul.f32 %v152, %v152
    %v278 = vsel %vm45, %v273, 0.0
    %279 = vadd.xlane.f32.xlu0 %v278
    %v280 = vpop.xlane.xlu0 %279
    %v281 = vsel %vm45, %v274, 0.0
    %282 = vadd.xlane.f32.xlu0 %v281
    %v283 = vpop.xlane.xlu0 %282
    %v284 = vsel %vm45, %v275, 0.0
    %285 = vadd.xlane.f32.xlu0 %v284
    %v286 = vpop.xlane.xlu0 %285
    %v287 = vsel %vm45, %v276, 0.0
    %288 = vadd.xlane.f32.xlu0 %v287
    %v289 = vpop.xlane.xlu0 %288
    %v290 = vsel %vm266, %v277, 0.0
    %291 = vadd.xlane.f32.xlu0 %v290
    %v292 = vpop.xlane.xlu0 %291
    %v293 = vmax.f32 %v280, 1e-24
    %v294 = vmax.f32 %v283, 1e-24
    %v295 = vmax.f32 %v286, 1e-24
    %v296 = vmax.f32 %v289, 1e-24
    %v297 = vmax.f32 %v292, 1e-24
    %v298 = vrsqrt.pop %v293
    %v299 = vmul.f32 %v298, %v293
    %v300 = vmul.f32 %v299, %v298
    %v301 = vmul.f32 0.5, %v300
    %v302 = vsub.f32 1.5, %v301
    %v303 = vmul.f32 %v298, %v302
    %vm304 = vweird.f32 %v293
    %vm305 = vweird.f32 %v298
    %vm306 = vmor %vm304, %vm305
    %v307 = vsel %vm306, %v298, %v303
    %v308 = vrsqrt.pop %v294
    %v309 = vmul.f32 %v308, %v294
    %v310 = vmul.f32 %v309, %v308
    %v311 = vmul.f32 0.5, %v310
    %v312 = vsub.f32 1.5, %v311
    %v313 = vmul.f32 %v308, %v312
    %vm314 = vweird.f32 %v294
    %vm315 = vweird.f32 %v308
    %vm316 = vmor %vm314, %vm315
    %v317 = vsel %vm316, %v308, %v313
    %v318 = vrsqrt.pop %v295
    %v319 = vmul.f32 %v318, %v295
    %v320 = vmul.f32 %v319, %v318
    %v321 = vmul.f32 0.5, %v320
    %v322 = vsub.f32 1.5, %v321
    %v323 = vmul.f32 %v318, %v322
    %vm324 = vweird.f32 %v295
    %vm325 = vweird.f32 %v318
    %vm326 = vmor %vm324, %vm325
    %v327 = vsel %vm326, %v318, %v323
    %v328 = vrsqrt.pop %v296
    %v329 = vmul.f32 %v328, %v296
    %v330 = vmul.f32 %v329, %v328
    %v331 = vmul.f32 0.5, %v330
    %v332 = vsub.f32 1.5, %v331
    %v333 = vmul.f32 %v328, %v332
    %vm334 = vweird.f32 %v296
    %vm335 = vweird.f32 %v328
    %vm336 = vmor %vm334, %vm335
    %v337 = vsel %vm336, %v328, %v333
    %v338 = vrsqrt.pop %v297
    %v339 = vmul.f32 %v338, %v297
    %v340 = vmul.f32 %v339, %v338
    %v341 = vmul.f32 0.5, %v340
    %v342 = vsub.f32 1.5, %v341
    %v343 = vmul.f32 %v338, %v342
    %vm344 = vweird.f32 %v297
    %vm345 = vweird.f32 %v338
    %vm346 = vmor %vm344, %vm345
    %v347 = vsel %vm346, %v338, %v343
    %v348 = vmul.f32 %v148, %v307
    %v349 = vmul.f32 %v149, %v317
    %v350 = vmul.f32 %v150, %v327
    %v351 = vmul.f32 %v151, %v337
    %v352 = vmul.f32 %v152, %v347
    %353 = vst.msk [vmem:[#allocation2] sm:$0xff] %vm45, %v348
    %354 = vst.msk [vmem:[#allocation2 + $0x8] sm:$0xff] %vm45, %v349
    %355 = vst.msk [vmem:[#allocation2 + $0x10] sm:$0xff] %vm45, %v350
    %356 = vst.msk [vmem:[#allocation2 + $0x18] sm:$0xff] %vm45, %v351
    %357 = vst.msk [vmem:[#allocation2 + $0x20] sm:$0xf] %vm266, %v352
    %v358 = vmul.f32 %v257, %v257
    %v359 = vmul.f32 %v258, %v258
    %v360 = vmul.f32 %v259, %v259
    %v361 = vmul.f32 %v260, %v260
    %v362 = vmul.f32 %v261, %v261
    %v363 = vsel %vm45, %v358, 0.0
    %364 = vadd.xlane.f32.xlu0 %v363
    %v365 = vpop.xlane.xlu0 %364
    %v366 = vsel %vm45, %v359, 0.0
    %367 = vadd.xlane.f32.xlu0 %v366
    %v368 = vpop.xlane.xlu0 %367
    %v369 = vsel %vm45, %v360, 0.0
    %370 = vadd.xlane.f32.xlu0 %v369
    %v371 = vpop.xlane.xlu0 %370
    %v372 = vsel %vm45, %v361, 0.0
    %373 = vadd.xlane.f32.xlu0 %v372
    %v374 = vpop.xlane.xlu0 %373
    %v375 = vsel %vm266, %v362, 0.0
    %376 = vadd.xlane.f32.xlu0 %v375
    %v377 = vpop.xlane.xlu0 %376
    %v378 = vmax.f32 %v365, 1e-24
    %v379 = vmax.f32 %v368, 1e-24
    %v380 = vmax.f32 %v371, 1e-24
    %v381 = vmax.f32 %v374, 1e-24
    %v382 = vmax.f32 %v377, 1e-24
    %v383 = vrsqrt.pop %v378
    %v384 = vmul.f32 %v383, %v378
    %v385 = vmul.f32 %v384, %v383
    %v386 = vmul.f32 0.5, %v385
    %v387 = vsub.f32 1.5, %v386
    %v388 = vmul.f32 %v383, %v387
    %vm389 = vweird.f32 %v378
    %vm390 = vweird.f32 %v383
    %vm391 = vmor %vm389, %vm390
    %v392 = vsel %vm391, %v383, %v388
    %v393 = vrsqrt.pop %v379
    %v394 = vmul.f32 %v393, %v379
    %v395 = vmul.f32 %v394, %v393
    %v396 = vmul.f32 0.5, %v395
    %v397 = vsub.f32 1.5, %v396
    %v398 = vmul.f32 %v393, %v397
    %vm399 = vweird.f32 %v379
    %vm400 = vweird.f32 %v393
    %vm401 = vmor %vm399, %vm400
    %v402 = vsel %vm401, %v393, %v398
    %v403 = vrsqrt.pop %v380
    %v404 = vmul.f32 %v403, %v380
    %v405 = vmul.f32 %v404, %v403
    %v406 = vmul.f32 0.5, %v405
    %v407 = vsub.f32 1.5, %v406
    %v408 = vmul.f32 %v403, %v407
    %vm409 = vweird.f32 %v380
    %vm410 = vweird.f32 %v403
    %vm411 = vmor %vm409, %vm410
    %v412 = vsel %vm411, %v403, %v408
    %v413 = vrsqrt.pop %v381
    %v414 = vmul.f32 %v413, %v381
    %v415 = vmul.f32 %v414, %v413
    %v416 = vmul.f32 0.5, %v415
    %v417 = vsub.f32 1.5, %v416
    %v418 = vmul.f32 %v413, %v417
    %vm419 = vweird.f32 %v381
    %vm420 = vweird.f32 %v413
    %vm421 = vmor %vm419, %vm420
    %v422 = vsel %vm421, %v413, %v418
    %v423 = vrsqrt.pop %v382
    %v424 = vmul.f32 %v423, %v382
    %v425 = vmul.f32 %v424, %v423
    %v426 = vmul.f32 0.5, %v425
    %v427 = vsub.f32 1.5, %v426
    %v428 = vmul.f32 %v423, %v427
    %vm429 = vweird.f32 %v382
    %vm430 = vweird.f32 %v423
    %vm431 = vmor %vm429, %vm430
    %v432 = vsel %vm431, %v423, %v428
    %v433 = vmul.f32 %v257, %v392
    %v434 = vmul.f32 %v258, %v402
    %v435 = vmul.f32 %v259, %v412
    %v436 = vmul.f32 %v260, %v422
    %v437 = vmul.f32 %v261, %v432
    %438 = vst.msk [vmem:[#allocation3] sm:$0xff] %vm45, %v433
    %439 = vst.msk [vmem:[#allocation3 + $0x8] sm:$0xff] %vm45, %v434
    %440 = vst.msk [vmem:[#allocation3 + $0x10] sm:$0xff] %vm45, %v435
    %441 = vst.msk [vmem:[#allocation3 + $0x18] sm:$0xff] %vm45, %v436
    %442 = vst.msk [vmem:[#allocation3 + $0x20] sm:$0xf] %vm266, %v437
    %v443 = vlaneseq
    %v444 = vshrl.u32 %v443, 7
    %v445 = vadd.s32 %v444, 8
    %v446 = vadd.s32 %v444, 16
    %v447 = vadd.s32 %v444, 24
    %v448 = vlaneseq
    %v449 = vand.u32 %v448, 127
    %vm450 = vcmp.eq.s32.totalorder %v444, %v449
    %vm451 = vcmp.eq.s32.totalorder %v445, %v449
    %vm452 = vcmp.eq.s32.totalorder %v446, %v449
    %vm453 = vcmp.eq.s32.totalorder %v447, %v449
    %v454 = vadd.s32 %v445, 16
    %v455 = vadd.s32 %v446, 16
    %v456 = vadd.s32 %v447, 16
    %vm457 = vcmp.eq.s32.totalorder %v449, %v446
    %vm458 = vcmp.eq.s32.totalorder %v449, %v454
    %vm459 = vcmp.eq.s32.totalorder %v449, %v455
    %vm460 = vcmp.eq.s32.totalorder %v449, %v456
    %v461 = vadd.s32 %v449, 16
    %vm462 = vcmp.eq.s32.totalorder %v444, %v461
    %vm463 = vcmp.eq.s32.totalorder %v445, %v461
    %vm464 = vcmp.eq.s32.totalorder %v446, %v461
    %vm465 = vcmp.eq.s32.totalorder %v447, %v461
    %vm466 = vmor %vm457, %vm462
    %vm467 = vmor %vm458, %vm463
    %vm468 = vmor %vm459, %vm464
    %vm469 = vmor %vm460, %vm465
    %v470 = vld [vmem:[#allocation2 + $0x1] sm:$0xff]
    %v471 = vld [vmem:[#allocation3 + $0x1] sm:$0xff]
    %v472 = vld [vmem:[#allocation2] sm:$0xff]
    %v473 = vld [vmem:[#allocation3] sm:$0xff]
    %v474 = vmul.f32 %v470, %v470
    %v475 = vmul.f32 %v471, %v471
    %v476 = vmul.f32 %v472, %v472
    %v477 = vmul.f32 %v473, %v473
    %v478 = vsel %vm45, %v474, 0.0
    %479 = vadd.xlane.f32.xlu0 %v478
    %v480 = vpop.xlane.xlu0 %479
    %v481 = vsel %vm45, %v475, 0.0
    %482 = vadd.xlane.f32.xlu0 %v481
    %v483 = vpop.xlane.xlu0 %482
    %v484 = vsel %vm45, %v476, 0.0
    %485 = vadd.xlane.f32.xlu0 %v484
    %v486 = vpop.xlane.xlu0 %485
    %v487 = vsel %vm45, %v477, 0.0
    %488 = vadd.xlane.f32.xlu0 %v487
    %v489 = vpop.xlane.xlu0 %488
    %v490 = vrsqrt.pop %v480
    %v491 = vmul.f32 %v490, %v480
    %v492 = vmul.f32 %v491, %v490
    %v493 = vmul.f32 0.5, %v492
    %v494 = vsub.f32 1.5, %v493
    %v495 = vmul.f32 %v490, %v494
    %v496 = vmul.f32 %v480, %v495
    %vm497 = vcmp.eq.f32.partialorder %v480, inf
    %v498 = vsel %vm497, %v480, %v496
    %vm499 = vcmp.eq.f32.partialorder %v480, 0.0
    %v500 = vand.u32 %v480, 2147483648
    %v501 = vsel %vm499, %v500, %v498
    %v502 = vrsqrt.pop %v483
    %v503 = vmul.f32 %v502, %v483
    %v504 = vmul.f32 %v503, %v502
    %v505 = vmul.f32 0.5, %v504
    %v506 = vsub.f32 1.5, %v505
    %v507 = vmul.f32 %v502, %v506
    %v508 = vmul.f32 %v483, %v507
    %vm509 = vcmp.eq.f32.partialorder %v483, inf
    %v510 = vsel %vm509, %v483, %v508
    %vm511 = vcmp.eq.f32.partialorder %v483, 0.0
    %v512 = vand.u32 %v483, 2147483648
    %v513 = vsel %vm511, %v512, %v510
    %v514 = vrsqrt.pop %v486
    %v515 = vmul.f32 %v514, %v486
    %v516 = vmul.f32 %v515, %v514
    %v517 = vmul.f32 0.5, %v516
    %v518 = vsub.f32 1.5, %v517
    %v519 = vmul.f32 %v514, %v518
    %v520 = vmul.f32 %v486, %v519
    %vm521 = vcmp.eq.f32.partialorder %v486, inf
    %v522 = vsel %vm521, %v486, %v520
    %vm523 = vcmp.eq.f32.partialorder %v486, 0.0
    %v524 = vand.u32 %v486, 2147483648
    %v525 = vsel %vm523, %v524, %v522
    %v526 = vrsqrt.pop %v489
    %v527 = vmul.f32 %v526, %v489
    %v528 = vmul.f32 %v527, %v526
    %v529 = vmul.f32 0.5, %v528
    %v530 = vsub.f32 1.5, %v529
    %v531 = vmul.f32 %v526, %v530
    %v532 = vmul.f32 %v489, %v531
    %vm533 = vcmp.eq.f32.partialorder %v489, inf
    %v534 = vsel %vm533, %v489, %v532
    %vm535 = vcmp.eq.f32.partialorder %v489, 0.0
    %v536 = vand.u32 %v489, 2147483648
    %v537 = vsel %vm535, %v536, %v534
    %v539 = vsel %vm45, %v470, 0
    %v542 = vsel %vm45, %v471, 0
    %v545 = vsel %vm45, %v472, 0
    %v548 = vsel %vm45, %v473, 0
    %550 = vmatpush.xpose.msra.mxu0 0.0
    %551 = vmatpush.xpose.msra.mxu0 0.0
    %552 = vmatpush.xpose.msra.mxu0 0.0
    %553 = vmatpush.xpose.msra.mxu0 0.0
    %554 = vmatpush.xpose.msra.mxu0 0.0
    %555 = vmatpush.xpose.msra.mxu0 0.0
    %556 = vmatpush.xpose.msra.mxu0 0.0
    %557 = vmatpush.xpose.msra.mxu0 0.0
    %558 = vmatpush.xpose.msra.mxu0 0.0
    %559 = vmatpush.xpose.msra.mxu0 0.0
    %560 = vmatpush.xpose.msra.mxu0 0.0
    %561 = vmatpush.xpose.msra.mxu0 0.0
    %562 = vmatpush.xpose.msra.mxu0 %v548
    %563 = vmatpush.xpose.msra.mxu0 %v545
    %564 = vmatpush.xpose.msra.mxu0 %v542
    %565 = vmatpush.xpose.msra.mxu0 %v539
    %566 = vmatmul.f32.gmra.mxu0 %v539
    %v567 = vpop.f32.mrf.mxu0
    %v568 = vadd.f32 0.0, %v567
    %569 = vmatmul.f32.gmra.mxu0 %v542
    %v570 = vpop.f32.mrf.mxu0
    %v571 = vadd.f32 0.0, %v570
    %572 = vmatmul.f32.gmra.mxu0 %v545
    %v573 = vpop.f32.mrf.mxu0
    %v574 = vadd.f32 0.0, %v573
    %575 = vmatmul.f32.gmra.mxu0 %v548
    %v576 = vpop.f32.mrf.mxu0
    %v577 = vadd.f32 0.0, %v576
    %578 = vdwg.mxu0
    %vm579 = vcmask 7168
    %v581 = vsel %vm579, %v501, 0
    %v584 = vsel %vm579, %v513, 0
    %v587 = vsel %vm579, %v525, 0
    %v590 = vsel %vm579, %v537, 0
    %592 = vmatpush.xpose.msra.mxu0 0.0
    %593 = vmatpush.xpose.msra.mxu0 0.0
    %594 = vmatpush.xpose.msra.mxu0 0.0
    %595 = vmatpush.xpose.msra.mxu0 0.0
    %596 = vmatpush.xpose.msra.mxu0 0.0
    %597 = vmatpush.xpose.msra.mxu0 0.0
    %598 = vmatpush.xpose.msra.mxu0 0.0
    %599 = vmatpush.xpose.msra.mxu0 0.0
    %600 = vmatpush.xpose.msra.mxu0 0.0
    %601 = vmatpush.xpose.msra.mxu0 0.0
    %602 = vmatpush.xpose.msra.mxu0 0.0
    %603 = vmatpush.xpose.msra.mxu0 0.0
    %604 = vmatpush.xpose.msra.mxu0 %v590
    %605 = vmatpush.xpose.msra.mxu0 %v587
    %606 = vmatpush.xpose.msra.mxu0 %v584
    %607 = vmatpush.xpose.msra.mxu0 %v581
    %608 = vmatmul.f32.gmra.mxu0 %v581
    %v609 = vpop.f32.mrf.mxu0
    %v610 = vadd.f32 0.0, %v609
    %611 = vmatmul.f32.gmra.mxu0 %v584
    %v612 = vpop.f32.mrf.mxu0
    %v613 = vadd.f32 0.0, %v612
    %614 = vmatmul.f32.gmra.mxu0 %v587
    %v615 = vpop.f32.mrf.mxu0
    %v616 = vadd.f32 0.0, %v615
    %617 = vmatmul.f32.gmra.mxu0 %v590
    %v618 = vpop.f32.mrf.mxu0
    %v619 = vadd.f32 0.0, %v618
    %620 = vdwg.mxu0
    %v621 = vmax.f32 %v610, 1e-08
    %v622 = vmax.f32 %v613, 1e-08
    %v623 = vmax.f32 %v616, 1e-08
    %v624 = vmax.f32 %v619, 1e-08
    %v625 = vrcp.pop %v621
    %v626 = vmul.f32 %v621, %v625
    %v627 = vsub.f32 1.0, %v626
    %v628 = vmul.f32 %v625, %v627
    %v629 = vadd.f32 %v625, %v628
    %vm630 = vweird.f32 %v621
    %vm631 = vweird.f32 %v625
    %vm632 = vmor %vm630, %vm631
    %v633 = vsel %vm632, %v625, %v629
    %v634 = vand.u32 2147483647, %v621
    %vm635 = vcmp.eq.f32.partialorder %v634, 8.507059e+37
    %v636 = vand.u32 %v621, 2147483648
    %v637 = vor.u32 1.1754944e-38, %v636
    %v638 = vsel %vm635, %v637, %v633
    %v639 = vrcp.pop %v622
    %v640 = vmul.f32 %v622, %v639
    %v641 = vsub.f32 1.0, %v640
    %v642 = vmul.f32 %v639, %v641
    %v643 = vadd.f32 %v639, %v642
    %vm644 = vweird.f32 %v622
    %vm645 = vweird.f32 %v639
    %vm646 = vmor %vm644, %vm645
    %v647 = vsel %vm646, %v639, %v643
    %v648 = vand.u32 2147483647, %v622
    %vm649 = vcmp.eq.f32.partialorder %v648, 8.507059e+37
    %v650 = vand.u32 %v622, 2147483648
    %v651 = vor.u32 1.1754944e-38, %v650
    %v652 = vsel %vm649, %v651, %v647
    %v653 = vrcp.pop %v623
    %v654 = vmul.f32 %v623, %v653
    %v655 = vsub.f32 1.0, %v654
    %v656 = vmul.f32 %v653, %v655
    %v657 = vadd.f32 %v653, %v656
    %vm658 = vweird.f32 %v623
    %vm659 = vweird.f32 %v653
    %vm660 = vmor %vm658, %vm659
    %v661 = vsel %vm660, %v653, %v657
    %v662 = vand.u32 2147483647, %v623
    %vm663 = vcmp.eq.f32.partialorder %v662, 8.507059e+37
    %v664 = vand.u32 %v623, 2147483648
    %v665 = vor.u32 1.1754944e-38, %v664
    %v666 = vsel %vm663, %v665, %v661
    %v667 = vrcp.pop %v624
    %v668 = vmul.f32 %v624, %v667
    %v669 = vsub.f32 1.0, %v668
    %v670 = vmul.f32 %v667, %v669
    %v671 = vadd.f32 %v667, %v670
    %vm672 = vweird.f32 %v624
    %vm673 = vweird.f32 %v667
    %vm674 = vmor %vm672, %vm673
    %v675 = vsel %vm674, %v667, %v671
    %v676 = vand.u32 2147483647, %v624
    %vm677 = vcmp.eq.f32.partialorder %v676, 8.507059e+37
    %v678 = vand.u32 %v624, 2147483648
    %v679 = vor.u32 1.1754944e-38, %v678
    %v680 = vsel %vm677, %v679, %v675
    %v681 = vmul.f32 %v568, %v638
    %v682 = vmul.f32 %v571, %v652
    %v683 = vmul.f32 %v574, %v666
    %v684 = vmul.f32 %v577, %v680
    %v685 = vmul.f32 %v681, 10.0
    %v686 = vmul.f32 %v682, 10.0
    %v687 = vmul.f32 %v683, 10.0
    %v688 = vmul.f32 %v684, 10.0
    %v689 = vmul.f32 %v685, 1.442695
    %v690 = vpow.pop %v689
    %v691 = vmul.f32 %v686, 1.442695
    %v692 = vpow.pop %v691
    %v693 = vmul.f32 %v687, 1.442695
    %v694 = vpow.pop %v693
    %v695 = vmul.f32 %v688, 1.442695
    %v696 = vpow.pop %v695
    %v697 = vsel %vm450, 0.0, %v690
    %v698 = vsel %vm451, 0.0, %v692
    %v699 = vsel %vm452, 0.0, %v694
    %v700 = vsel %vm453, 0.0, %v696
    %v701 = vsel %vm45, %v697, 0.0
    %702 = vadd.xlane.f32.xlu0 %v701
    %v703 = vpop.xlane.xlu0 %702
    %v704 = vsel %vm45, %v698, 0.0
    %705 = vadd.xlane.f32.xlu0 %v704
    %v706 = vpop.xlane.xlu0 %705
    %v707 = vsel %vm45, %v699, 0.0
    %708 = vadd.xlane.f32.xlu0 %v707
    %v709 = vpop.xlane.xlu0 %708
    %v710 = vsel %vm45, %v700, 0.0
    %711 = vadd.xlane.f32.xlu0 %v710
    %v712 = vpop.xlane.xlu0 %711
    %v713 = vlog2.pop %v703
    %v714 = vmul.f32 %v713, 0.6931472
    %v715 = vlog2.pop %v706
    %v716 = vmul.f32 %v715, 0.6931472
    %v717 = vlog2.pop %v709
    %v718 = vmul.f32 %v717, 0.6931472
    %v719 = vlog2.pop %v712
    %v720 = vmul.f32 %v719, 0.6931472
    %v721 = vsel %vm579, %v714, 0.0
    %v722 = vsel %vm579, %v716, 0.0
    %v723 = vadd.f32 %v721, %v722
    %v724 = vsel %vm579, %v718, 0.0
    %v725 = vadd.f32 %v723, %v724
    %v726 = vsel %vm579, %v720, 0.0
    %v727 = vadd.f32 %v725, %v726
    %728 = vadd.xlane.f32.xlu0 %v727
    %v729 = vpop.xlane.xlu0 %728
    %v730 = vrot.slane %v729, 4
    %v731 = vadd.f32 %v729, %v730
    %v732 = vrot.slane %v731, 2
    %v733 = vadd.f32 %v731, %v732
    %v734 = vrot.slane %v733, 1
    %v735 = vadd.f32 %v733, %v734
    %s736 = vtos %v735
    %v737 = vstv %s736
    %v738 = vsel %vm466, %v681, 0.0
    %v739 = vsel %vm467, %v682, 0.0
    %v740 = vsel %vm468, %v683, 0.0
    %v741 = vsel %vm469, %v684, 0.0
    %v742 = vsel %vm45, %v738, 0.0
    %v743 = vsel %vm45, %v739, 0.0
    %v744 = vadd.f32 %v742, %v743
    %v745 = vsel %vm45, %v740, 0.0
    %v746 = vadd.f32 %v744, %v745
    %v747 = vsel %vm45, %v741, 0.0
    %v748 = vadd.f32 %v746, %v747
    %749 = vadd.xlane.f32.xlu0 %v748
    %v750 = vpop.xlane.xlu0 %749
    %v751 = vrot.slane %v750, 4
    %v752 = vadd.f32 %v750, %v751
    %v753 = vrot.slane %v752, 2
    %v754 = vadd.f32 %v752, %v753
    %v755 = vrot.slane %v754, 1
    %v756 = vadd.f32 %v754, %v755
    %s757 = vtos %v756
    %v758 = vstv %s757
    %v759 = vmul.f32 %v758, 10.0
    %v760 = vsub.f32 %v737, %v759
    %v761 = vmul.f32 %v760, 0.03125
    %v762 = vadd.f32 %v761, 0.0
    %v763 = vld [vmem:[#allocation2 + $0xa] sm:$0xff]
    %v764 = vld [vmem:[#allocation3 + $0xa] sm:$0xff]
    %v765 = vld [vmem:[#allocation2 + $0x9] sm:$0xff]
    %v766 = vld [vmem:[#allocation3 + $0x9] sm:$0xff]
    %v767 = vmul.f32 %v763, %v763
    %v768 = vmul.f32 %v764, %v764
    %v769 = vmul.f32 %v765, %v765
    %v770 = vmul.f32 %v766, %v766
    %v771 = vsel %vm45, %v767, 0.0
    %772 = vadd.xlane.f32.xlu0 %v771
    %v773 = vpop.xlane.xlu0 %772
    %v774 = vsel %vm45, %v768, 0.0
    %775 = vadd.xlane.f32.xlu0 %v774
    %v776 = vpop.xlane.xlu0 %775
    %v777 = vsel %vm45, %v769, 0.0
    %778 = vadd.xlane.f32.xlu0 %v777
    %v779 = vpop.xlane.xlu0 %778
    %v780 = vsel %vm45, %v770, 0.0
    %781 = vadd.xlane.f32.xlu0 %v780
    %v782 = vpop.xlane.xlu0 %781
    %v783 = vrsqrt.pop %v773
    %v784 = vmul.f32 %v783, %v773
    %v785 = vmul.f32 %v784, %v783
    %v786 = vmul.f32 0.5, %v785
    %v787 = vsub.f32 1.5, %v786
    %v788 = vmul.f32 %v783, %v787
    %v789 = vmul.f32 %v773, %v788
    %vm790 = vcmp.eq.f32.partialorder %v773, inf
    %v791 = vsel %vm790, %v773, %v789
    %vm792 = vcmp.eq.f32.partialorder %v773, 0.0
    %v793 = vand.u32 %v773, 2147483648
    %v794 = vsel %vm792, %v793, %v791
    %v795 = vrsqrt.pop %v776
    %v796 = vmul.f32 %v795, %v776
    %v797 = vmul.f32 %v796, %v795
    %v798 = vmul.f32 0.5, %v797
    %v799 = vsub.f32 1.5, %v798
    %v800 = vmul.f32 %v795, %v799
    %v801 = vmul.f32 %v776, %v800
    %vm802 = vcmp.eq.f32.partialorder %v776, inf
    %v803 = vsel %vm802, %v776, %v801
    %vm804 = vcmp.eq.f32.partialorder %v776, 0.0
    %v805 = vand.u32 %v776, 2147483648
    %v806 = vsel %vm804, %v805, %v803
    %v807 = vrsqrt.pop %v779
    %v808 = vmul.f32 %v807, %v779
    %v809 = vmul.f32 %v808, %v807
    %v810 = vmul.f32 0.5, %v809
    %v811 = vsub.f32 1.5, %v810
    %v812 = vmul.f32 %v807, %v811
    %v813 = vmul.f32 %v779, %v812
    %vm814 = vcmp.eq.f32.partialorder %v779, inf
    %v815 = vsel %vm814, %v779, %v813
    %vm816 = vcmp.eq.f32.partialorder %v779, 0.0
    %v817 = vand.u32 %v779, 2147483648
    %v818 = vsel %vm816, %v817, %v815
    %v819 = vrsqrt.pop %v782
    %v820 = vmul.f32 %v819, %v782
    %v821 = vmul.f32 %v820, %v819
    %v822 = vmul.f32 0.5, %v821
    %v823 = vsub.f32 1.5, %v822
    %v824 = vmul.f32 %v819, %v823
    %v825 = vmul.f32 %v782, %v824
    %vm826 = vcmp.eq.f32.partialorder %v782, inf
    %v827 = vsel %vm826, %v782, %v825
    %vm828 = vcmp.eq.f32.partialorder %v782, 0.0
    %v829 = vand.u32 %v782, 2147483648
    %v830 = vsel %vm828, %v829, %v827
    %v832 = vsel %vm45, %v763, 0
    %v835 = vsel %vm45, %v764, 0
    %v838 = vsel %vm45, %v765, 0
    %v841 = vsel %vm45, %v766, 0
    %843 = vmatpush.xpose.msra.mxu0 0.0
    %844 = vmatpush.xpose.msra.mxu0 0.0
    %845 = vmatpush.xpose.msra.mxu0 0.0
    %846 = vmatpush.xpose.msra.mxu0 0.0
    %847 = vmatpush.xpose.msra.mxu0 0.0
    %848 = vmatpush.xpose.msra.mxu0 0.0
    %849 = vmatpush.xpose.msra.mxu0 0.0
    %850 = vmatpush.xpose.msra.mxu0 0.0
    %851 = vmatpush.xpose.msra.mxu0 0.0
    %852 = vmatpush.xpose.msra.mxu0 0.0
    %853 = vmatpush.xpose.msra.mxu0 0.0
    %854 = vmatpush.xpose.msra.mxu0 0.0
    %855 = vmatpush.xpose.msra.mxu0 %v841
    %856 = vmatpush.xpose.msra.mxu0 %v838
    %857 = vmatpush.xpose.msra.mxu0 %v835
    %858 = vmatpush.xpose.msra.mxu0 %v832
    %859 = vmatmul.f32.gmra.mxu0 %v832
    %v860 = vpop.f32.mrf.mxu0
    %v861 = vadd.f32 0.0, %v860
    %862 = vmatmul.f32.gmra.mxu0 %v835
    %v863 = vpop.f32.mrf.mxu0
    %v864 = vadd.f32 0.0, %v863
    %865 = vmatmul.f32.gmra.mxu0 %v838
    %v866 = vpop.f32.mrf.mxu0
    %v867 = vadd.f32 0.0, %v866
    %868 = vmatmul.f32.gmra.mxu0 %v841
    %v869 = vpop.f32.mrf.mxu0
    %v870 = vadd.f32 0.0, %v869
    %871 = vdwg.mxu0
    %v873 = vsel %vm579, %v794, 0
    %v876 = vsel %vm579, %v806, 0
    %v879 = vsel %vm579, %v818, 0
    %v882 = vsel %vm579, %v830, 0
    %884 = vmatpush.xpose.msra.mxu0 0.0
    %885 = vmatpush.xpose.msra.mxu0 0.0
    %886 = vmatpush.xpose.msra.mxu0 0.0
    %887 = vmatpush.xpose.msra.mxu0 0.0
    %888 = vmatpush.xpose.msra.mxu0 0.0
    %889 = vmatpush.xpose.msra.mxu0 0.0
    %890 = vmatpush.xpose.msra.mxu0 0.0
    %891 = vmatpush.xpose.msra.mxu0 0.0
    %892 = vmatpush.xpose.msra.mxu0 0.0
    %893 = vmatpush.xpose.msra.mxu0 0.0
    %894 = vmatpush.xpose.msra.mxu0 0.0
    %895 = vmatpush.xpose.msra.mxu0 0.0
    %896 = vmatpush.xpose.msra.mxu0 %v882
    %897 = vmatpush.xpose.msra.mxu0 %v879
    %898 = vmatpush.xpose.msra.mxu0 %v876
    %899 = vmatpush.xpose.msra.mxu0 %v873
    %900 = vmatmul.f32.gmra.mxu0 %v873
    %v901 = vpop.f32.mrf.mxu0
    %v902 = vadd.f32 0.0, %v901
    %903 = vmatmul.f32.gmra.mxu0 %v876
    %v904 = vpop.f32.mrf.mxu0
    %v905 = vadd.f32 0.0, %v904
    %906 = vmatmul.f32.gmra.mxu0 %v879
    %v907 = vpop.f32.mrf.mxu0
    %v908 = vadd.f32 0.0, %v907
    %909 = vmatmul.f32.gmra.mxu0 %v882
    %v910 = vpop.f32.mrf.mxu0
    %v911 = vadd.f32 0.0, %v910
    %912 = vdwg.mxu0
    %v913 = vmax.f32 %v902, 1e-08
    %v914 = vmax.f32 %v905, 1e-08
    %v915 = vmax.f32 %v908, 1e-08
    %v916 = vmax.f32 %v911, 1e-08
    %v917 = vrcp.pop %v913
    %v918 = vmul.f32 %v913, %v917
    %v919 = vsub.f32 1.0, %v918
    %v920 = vmul.f32 %v917, %v919
    %v921 = vadd.f32 %v917, %v920
    %vm922 = vweird.f32 %v913
    %vm923 = vweird.f32 %v917
    %vm924 = vmor %vm922, %vm923
    %v925 = vsel %vm924, %v917, %v921
    %v926 = vand.u32 2147483647, %v913
    %vm927 = vcmp.eq.f32.partialorder %v926, 8.507059e+37
    %v928 = vand.u32 %v913, 2147483648
    %v929 = vor.u32 1.1754944e-38, %v928
    %v930 = vsel %vm927, %v929, %v925
    %v931 = vrcp.pop %v914
    %v932 = vmul.f32 %v914, %v931
    %v933 = vsub.f32 1.0, %v932
    %v934 = vmul.f32 %v931, %v933
    %v935 = vadd.f32 %v931, %v934
    %vm936 = vweird.f32 %v914
    %vm937 = vweird.f32 %v931
    %vm938 = vmor %vm936, %vm937
    %v939 = vsel %vm938, %v931, %v935
    %v940 = vand.u32 2147483647, %v914
    %vm941 = vcmp.eq.f32.partialorder %v940, 8.507059e+37
    %v942 = vand.u32 %v914, 2147483648
    %v943 = vor.u32 1.1754944e-38, %v942
    %v944 = vsel %vm941, %v943, %v939
    %v945 = vrcp.pop %v915
    %v946 = vmul.f32 %v915, %v945
    %v947 = vsub.f32 1.0, %v946
    %v948 = vmul.f32 %v945, %v947
    %v949 = vadd.f32 %v945, %v948
    %vm950 = vweird.f32 %v915
    %vm951 = vweird.f32 %v945
    %vm952 = vmor %vm950, %vm951
    %v953 = vsel %vm952, %v945, %v949
    %v954 = vand.u32 2147483647, %v915
    %vm955 = vcmp.eq.f32.partialorder %v954, 8.507059e+37
    %v956 = vand.u32 %v915, 2147483648
    %v957 = vor.u32 1.1754944e-38, %v956
    %v958 = vsel %vm955, %v957, %v953
    %v959 = vrcp.pop %v916
    %v960 = vmul.f32 %v916, %v959
    %v961 = vsub.f32 1.0, %v960
    %v962 = vmul.f32 %v959, %v961
    %v963 = vadd.f32 %v959, %v962
    %vm964 = vweird.f32 %v916
    %vm965 = vweird.f32 %v959
    %vm966 = vmor %vm964, %vm965
    %v967 = vsel %vm966, %v959, %v963
    %v968 = vand.u32 2147483647, %v916
    %vm969 = vcmp.eq.f32.partialorder %v968, 8.507059e+37
    %v970 = vand.u32 %v916, 2147483648
    %v971 = vor.u32 1.1754944e-38, %v970
    %v972 = vsel %vm969, %v971, %v967
    %v973 = vmul.f32 %v861, %v930
    %v974 = vmul.f32 %v864, %v944
    %v975 = vmul.f32 %v867, %v958
    %v976 = vmul.f32 %v870, %v972
    %v977 = vmul.f32 %v973, 10.0
    %v978 = vmul.f32 %v974, 10.0
    %v979 = vmul.f32 %v975, 10.0
    %v980 = vmul.f32 %v976, 10.0
    %v981 = vmul.f32 %v977, 1.442695
    %v982 = vpow.pop %v981
    %v983 = vmul.f32 %v978, 1.442695
    %v984 = vpow.pop %v983
    %v985 = vmul.f32 %v979, 1.442695
    %v986 = vpow.pop %v985
    %v987 = vmul.f32 %v980, 1.442695
    %v988 = vpow.pop %v987
    %v989 = vsel %vm450, 0.0, %v982
    %v990 = vsel %vm451, 0.0, %v984
    %v991 = vsel %vm452, 0.0, %v986
    %v992 = vsel %vm453, 0.0, %v988
    %v993 = vsel %vm45, %v989, 0.0
    %994 = vadd.xlane.f32.xlu0 %v993
    %v995 = vpop.xlane.xlu0 %994
    %v996 = vsel %vm45, %v990, 0.0
    %997 = vadd.xlane.f32.xlu0 %v996
    %v998 = vpop.xlane.xlu0 %997
    %v999 = vsel %vm45, %v991, 0.0
    %1000 = vadd.xlane.f32.xlu0 %v999
    %v1001 = vpop.xlane.xlu0 %1000
    %v1002 = vsel %vm45, %v992, 0.0
    %1003 = vadd.xlane.f32.xlu0 %v1002
    %v1004 = vpop.xlane.xlu0 %1003
    %v1005 = vlog2.pop %v995
    %v1006 = vmul.f32 %v1005, 0.6931472
    %v1007 = vlog2.pop %v998
    %v1008 = vmul.f32 %v1007, 0.6931472
    %v1009 = vlog2.pop %v1001
    %v1010 = vmul.f32 %v1009, 0.6931472
    %v1011 = vlog2.pop %v1004
    %v1012 = vmul.f32 %v1011, 0.6931472
    %v1013 = vsel %vm579, %v1006, 0.0
    %v1014 = vsel %vm579, %v1008, 0.0
    %v1015 = vadd.f32 %v1013, %v1014
    %v1016 = vsel %vm579, %v1010, 0.0
    %v1017 = vadd.f32 %v1015, %v1016
    %v1018 = vsel %vm579, %v1012, 0.0
    %v1019 = vadd.f32 %v1017, %v1018
    %1020 = vadd.xlane.f32.xlu0 %v1019
    %v1021 = vpop.xlane.xlu0 %1020
    %v1022 = vrot.slane %v1021, 4
    %v1023 = vadd.f32 %v1021, %v1022
    %v1024 = vrot.slane %v1023, 2
    %v1025 = vadd.f32 %v1023, %v1024
    %v1026 = vrot.slane %v1025, 1
    %v1027 = vadd.f32 %v1025, %v1026
    %s1028 = vtos %v1027
    %v1029 = vstv %s1028
    %v1030 = vsel %vm466, %v973, 0.0
    %v1031 = vsel %vm467, %v974, 0.0
    %v1032 = vsel %vm468, %v975, 0.0
    %v1033 = vsel %vm469, %v976, 0.0
    %v1034 = vsel %vm45, %v1030, 0.0
    %v1035 = vsel %vm45, %v1031, 0.0
    %v1036 = vadd.f32 %v1034, %v1035
    %v1037 = vsel %vm45, %v1032, 0.0
    %v1038 = vadd.f32 %v1036, %v1037
    %v1039 = vsel %vm45, %v1033, 0.0
    %v1040 = vadd.f32 %v1038, %v1039
    %1041 = vadd.xlane.f32.xlu0 %v1040
    %v1042 = vpop.xlane.xlu0 %1041
    %v1043 = vrot.slane %v1042, 4
    %v1044 = vadd.f32 %v1042, %v1043
    %v1045 = vrot.slane %v1044, 2
    %v1046 = vadd.f32 %v1044, %v1045
    %v1047 = vrot.slane %v1046, 1
    %v1048 = vadd.f32 %v1046, %v1047
    %s1049 = vtos %v1048
    %v1050 = vstv %s1049
    %v1051 = vmul.f32 %v1050, 10.0
    %v1052 = vsub.f32 %v1029, %v1051
    %v1053 = vmul.f32 %v1052, 0.03125
    %v1054 = vadd.f32 %v762, %v1053
    %v1055 = vld [vmem:[#allocation2 + $0x13] sm:$0xff]
    %v1056 = vld [vmem:[#allocation3 + $0x13] sm:$0xff]
    %v1057 = vld [vmem:[#allocation2 + $0x12] sm:$0xff]
    %v1058 = vld [vmem:[#allocation3 + $0x12] sm:$0xff]
    %v1059 = vmul.f32 %v1055, %v1055
    %v1060 = vmul.f32 %v1056, %v1056
    %v1061 = vmul.f32 %v1057, %v1057
    %v1062 = vmul.f32 %v1058, %v1058
    %v1063 = vsel %vm45, %v1059, 0.0
    %1064 = vadd.xlane.f32.xlu0 %v1063
    %v1065 = vpop.xlane.xlu0 %1064
    %v1066 = vsel %vm45, %v1060, 0.0
    %1067 = vadd.xlane.f32.xlu0 %v1066
    %v1068 = vpop.xlane.xlu0 %1067
    %v1069 = vsel %vm45, %v1061, 0.0
    %1070 = vadd.xlane.f32.xlu0 %v1069
    %v1071 = vpop.xlane.xlu0 %1070
    %v1072 = vsel %vm45, %v1062, 0.0
    %1073 = vadd.xlane.f32.xlu0 %v1072
    %v1074 = vpop.xlane.xlu0 %1073
    %v1075 = vrsqrt.pop %v1065
    %v1076 = vmul.f32 %v1075, %v1065
    %v1077 = vmul.f32 %v1076, %v1075
    %v1078 = vmul.f32 0.5, %v1077
    %v1079 = vsub.f32 1.5, %v1078
    %v1080 = vmul.f32 %v1075, %v1079
    %v1081 = vmul.f32 %v1065, %v1080
    %vm1082 = vcmp.eq.f32.partialorder %v1065, inf
    %v1083 = vsel %vm1082, %v1065, %v1081
    %vm1084 = vcmp.eq.f32.partialorder %v1065, 0.0
    %v1085 = vand.u32 %v1065, 2147483648
    %v1086 = vsel %vm1084, %v1085, %v1083
    %v1087 = vrsqrt.pop %v1068
    %v1088 = vmul.f32 %v1087, %v1068
    %v1089 = vmul.f32 %v1088, %v1087
    %v1090 = vmul.f32 0.5, %v1089
    %v1091 = vsub.f32 1.5, %v1090
    %v1092 = vmul.f32 %v1087, %v1091
    %v1093 = vmul.f32 %v1068, %v1092
    %vm1094 = vcmp.eq.f32.partialorder %v1068, inf
    %v1095 = vsel %vm1094, %v1068, %v1093
    %vm1096 = vcmp.eq.f32.partialorder %v1068, 0.0
    %v1097 = vand.u32 %v1068, 2147483648
    %v1098 = vsel %vm1096, %v1097, %v1095
    %v1099 = vrsqrt.pop %v1071
    %v1100 = vmul.f32 %v1099, %v1071
    %v1101 = vmul.f32 %v1100, %v1099
    %v1102 = vmul.f32 0.5, %v1101
    %v1103 = vsub.f32 1.5, %v1102
    %v1104 = vmul.f32 %v1099, %v1103
    %v1105 = vmul.f32 %v1071, %v1104
    %vm1106 = vcmp.eq.f32.partialorder %v1071, inf
    %v1107 = vsel %vm1106, %v1071, %v1105
    %vm1108 = vcmp.eq.f32.partialorder %v1071, 0.0
    %v1109 = vand.u32 %v1071, 2147483648
    %v1110 = vsel %vm1108, %v1109, %v1107
    %v1111 = vrsqrt.pop %v1074
    %v1112 = vmul.f32 %v1111, %v1074
    %v1113 = vmul.f32 %v1112, %v1111
    %v1114 = vmul.f32 0.5, %v1113
    %v1115 = vsub.f32 1.5, %v1114
    %v1116 = vmul.f32 %v1111, %v1115
    %v1117 = vmul.f32 %v1074, %v1116
    %vm1118 = vcmp.eq.f32.partialorder %v1074, inf
    %v1119 = vsel %vm1118, %v1074, %v1117
    %vm1120 = vcmp.eq.f32.partialorder %v1074, 0.0
    %v1121 = vand.u32 %v1074, 2147483648
    %v1122 = vsel %vm1120, %v1121, %v1119
    %v1124 = vsel %vm45, %v1055, 0
    %v1127 = vsel %vm45, %v1056, 0
    %v1130 = vsel %vm45, %v1057, 0
    %v1133 = vsel %vm45, %v1058, 0
    %1135 = vmatpush.xpose.msra.mxu0 0.0
    %1136 = vmatpush.xpose.msra.mxu0 0.0
    %1137 = vmatpush.xpose.msra.mxu0 0.0
    %1138 = vmatpush.xpose.msra.mxu0 0.0
    %1139 = vmatpush.xpose.msra.mxu0 0.0
    %1140 = vmatpush.xpose.msra.mxu0 0.0
    %1141 = vmatpush.xpose.msra.mxu0 0.0
    %1142 = vmatpush.xpose.msra.mxu0 0.0
    %1143 = vmatpush.xpose.msra.mxu0 0.0
    %1144 = vmatpush.xpose.msra.mxu0 0.0
    %1145 = vmatpush.xpose.msra.mxu0 0.0
    %1146 = vmatpush.xpose.msra.mxu0 0.0
    %1147 = vmatpush.xpose.msra.mxu0 %v1133
    %1148 = vmatpush.xpose.msra.mxu0 %v1130
    %1149 = vmatpush.xpose.msra.mxu0 %v1127
    %1150 = vmatpush.xpose.msra.mxu0 %v1124
    %1151 = vmatmul.f32.gmra.mxu0 %v1124
    %v1152 = vpop.f32.mrf.mxu0
    %v1153 = vadd.f32 0.0, %v1152
    %1154 = vmatmul.f32.gmra.mxu0 %v1127
    %v1155 = vpop.f32.mrf.mxu0
    %v1156 = vadd.f32 0.0, %v1155
    %1157 = vmatmul.f32.gmra.mxu0 %v1130
    %v1158 = vpop.f32.mrf.mxu0
    %v1159 = vadd.f32 0.0, %v1158
    %1160 = vmatmul.f32.gmra.mxu0 %v1133
    %v1161 = vpop.f32.mrf.mxu0
    %v1162 = vadd.f32 0.0, %v1161
    %1163 = vdwg.mxu0
    %v1165 = vsel %vm579, %v1086, 0
    %v1168 = vsel %vm579, %v1098, 0
    %v1171 = vsel %vm579, %v1110, 0
    %v1174 = vsel %vm579, %v1122, 0
    %1176 = vmatpush.xpose.msra.mxu0 0.0
    %1177 = vmatpush.xpose.msra.mxu0 0.0
    %1178 = vmatpush.xpose.msra.mxu0 0.0
    %1179 = vmatpush.xpose.msra.mxu0 0.0
    %1180 = vmatpush.xpose.msra.mxu0 0.0
    %1181 = vmatpush.xpose.msra.mxu0 0.0
    %1182 = vmatpush.xpose.msra.mxu0 0.0
    %1183 = vmatpush.xpose.msra.mxu0 0.0
    %1184 = vmatpush.xpose.msra.mxu0 0.0
    %1185 = vmatpush.xpose.msra.mxu0 0.0
    %1186 = vmatpush.xpose.msra.mxu0 0.0
    %1187 = vmatpush.xpose.msra.mxu0 0.0
    %1188 = vmatpush.xpose.msra.mxu0 %v1174
    %1189 = vmatpush.xpose.msra.mxu0 %v1171
    %1190 = vmatpush.xpose.msra.mxu0 %v1168
    %1191 = vmatpush.xpose.msra.mxu0 %v1165
    %1192 = vmatmul.f32.gmra.mxu0 %v1165
    %v1193 = vpop.f32.mrf.mxu0
    %v1194 = vadd.f32 0.0, %v1193
    %1195 = vmatmul.f32.gmra.mxu0 %v1168
    %v1196 = vpop.f32.mrf.mxu0
    %v1197 = vadd.f32 0.0, %v1196
    %1198 = vmatmul.f32.gmra.mxu0 %v1171
    %v1199 = vpop.f32.mrf.mxu0
    %v1200 = vadd.f32 0.0, %v1199
    %1201 = vmatmul.f32.gmra.mxu0 %v1174
    %v1202 = vpop.f32.mrf.mxu0
    %v1203 = vadd.f32 0.0, %v1202
    %1204 = vdwg.mxu0
    %v1205 = vmax.f32 %v1194, 1e-08
    %v1206 = vmax.f32 %v1197, 1e-08
    %v1207 = vmax.f32 %v1200, 1e-08
    %v1208 = vmax.f32 %v1203, 1e-08
    %v1209 = vrcp.pop %v1205
    %v1210 = vmul.f32 %v1205, %v1209
    %v1211 = vsub.f32 1.0, %v1210
    %v1212 = vmul.f32 %v1209, %v1211
    %v1213 = vadd.f32 %v1209, %v1212
    %vm1214 = vweird.f32 %v1205
    %vm1215 = vweird.f32 %v1209
    %vm1216 = vmor %vm1214, %vm1215
    %v1217 = vsel %vm1216, %v1209, %v1213
    %v1218 = vand.u32 2147483647, %v1205
    %vm1219 = vcmp.eq.f32.partialorder %v1218, 8.507059e+37
    %v1220 = vand.u32 %v1205, 2147483648
    %v1221 = vor.u32 1.1754944e-38, %v1220
    %v1222 = vsel %vm1219, %v1221, %v1217
    %v1223 = vrcp.pop %v1206
    %v1224 = vmul.f32 %v1206, %v1223
    %v1225 = vsub.f32 1.0, %v1224
    %v1226 = vmul.f32 %v1223, %v1225
    %v1227 = vadd.f32 %v1223, %v1226
    %vm1228 = vweird.f32 %v1206
    %vm1229 = vweird.f32 %v1223
    %vm1230 = vmor %vm1228, %vm1229
    %v1231 = vsel %vm1230, %v1223, %v1227
    %v1232 = vand.u32 2147483647, %v1206
    %vm1233 = vcmp.eq.f32.partialorder %v1232, 8.507059e+37
    %v1234 = vand.u32 %v1206, 2147483648
    %v1235 = vor.u32 1.1754944e-38, %v1234
    %v1236 = vsel %vm1233, %v1235, %v1231
    %v1237 = vrcp.pop %v1207
    %v1238 = vmul.f32 %v1207, %v1237
    %v1239 = vsub.f32 1.0, %v1238
    %v1240 = vmul.f32 %v1237, %v1239
    %v1241 = vadd.f32 %v1237, %v1240
    %vm1242 = vweird.f32 %v1207
    %vm1243 = vweird.f32 %v1237
    %vm1244 = vmor %vm1242, %vm1243
    %v1245 = vsel %vm1244, %v1237, %v1241
    %v1246 = vand.u32 2147483647, %v1207
    %vm1247 = vcmp.eq.f32.partialorder %v1246, 8.507059e+37
    %v1248 = vand.u32 %v1207, 2147483648
    %v1249 = vor.u32 1.1754944e-38, %v1248
    %v1250 = vsel %vm1247, %v1249, %v1245
    %v1251 = vrcp.pop %v1208
    %v1252 = vmul.f32 %v1208, %v1251
    %v1253 = vsub.f32 1.0, %v1252
    %v1254 = vmul.f32 %v1251, %v1253
    %v1255 = vadd.f32 %v1251, %v1254
    %vm1256 = vweird.f32 %v1208
    %vm1257 = vweird.f32 %v1251
    %vm1258 = vmor %vm1256, %vm1257
    %v1259 = vsel %vm1258, %v1251, %v1255
    %v1260 = vand.u32 2147483647, %v1208
    %vm1261 = vcmp.eq.f32.partialorder %v1260, 8.507059e+37
    %v1262 = vand.u32 %v1208, 2147483648
    %v1263 = vor.u32 1.1754944e-38, %v1262
    %v1264 = vsel %vm1261, %v1263, %v1259
    %v1265 = vmul.f32 %v1153, %v1222
    %v1266 = vmul.f32 %v1156, %v1236
    %v1267 = vmul.f32 %v1159, %v1250
    %v1268 = vmul.f32 %v1162, %v1264
    %v1269 = vmul.f32 %v1265, 10.0
    %v1270 = vmul.f32 %v1266, 10.0
    %v1271 = vmul.f32 %v1267, 10.0
    %v1272 = vmul.f32 %v1268, 10.0
    %v1273 = vmul.f32 %v1269, 1.442695
    %v1274 = vpow.pop %v1273
    %v1275 = vmul.f32 %v1270, 1.442695
    %v1276 = vpow.pop %v1275
    %v1277 = vmul.f32 %v1271, 1.442695
    %v1278 = vpow.pop %v1277
    %v1279 = vmul.f32 %v1272, 1.442695
    %v1280 = vpow.pop %v1279
    %v1281 = vsel %vm450, 0.0, %v1274
    %v1282 = vsel %vm451, 0.0, %v1276
    %v1283 = vsel %vm452, 0.0, %v1278
    %v1284 = vsel %vm453, 0.0, %v1280
    %v1285 = vsel %vm45, %v1281, 0.0
    %1286 = vadd.xlane.f32.xlu0 %v1285
    %v1287 = vpop.xlane.xlu0 %1286
    %v1288 = vsel %vm45, %v1282, 0.0
    %1289 = vadd.xlane.f32.xlu0 %v1288
    %v1290 = vpop.xlane.xlu0 %1289
    %v1291 = vsel %vm45, %v1283, 0.0
    %1292 = vadd.xlane.f32.xlu0 %v1291
    %v1293 = vpop.xlane.xlu0 %1292
    %v1294 = vsel %vm45, %v1284, 0.0
    %1295 = vadd.xlane.f32.xlu0 %v1294
    %v1296 = vpop.xlane.xlu0 %1295
    %v1297 = vlog2.pop %v1287
    %v1298 = vmul.f32 %v1297, 0.6931472
    %v1299 = vlog2.pop %v1290
    %v1300 = vmul.f32 %v1299, 0.6931472
    %v1301 = vlog2.pop %v1293
    %v1302 = vmul.f32 %v1301, 0.6931472
    %v1303 = vlog2.pop %v1296
    %v1304 = vmul.f32 %v1303, 0.6931472
    %v1305 = vsel %vm579, %v1298, 0.0
    %v1306 = vsel %vm579, %v1300, 0.0
    %v1307 = vadd.f32 %v1305, %v1306
    %v1308 = vsel %vm579, %v1302, 0.0
    %v1309 = vadd.f32 %v1307, %v1308
    %v1310 = vsel %vm579, %v1304, 0.0
    %v1311 = vadd.f32 %v1309, %v1310
    %1312 = vadd.xlane.f32.xlu0 %v1311
    %v1313 = vpop.xlane.xlu0 %1312
    %v1314 = vrot.slane %v1313, 4
    %v1315 = vadd.f32 %v1313, %v1314
    %v1316 = vrot.slane %v1315, 2
    %v1317 = vadd.f32 %v1315, %v1316
    %v1318 = vrot.slane %v1317, 1
    %v1319 = vadd.f32 %v1317, %v1318
    %s1320 = vtos %v1319
    %v1321 = vstv %s1320
    %v1322 = vsel %vm466, %v1265, 0.0
    %v1323 = vsel %vm467, %v1266, 0.0
    %v1324 = vsel %vm468, %v1267, 0.0
    %v1325 = vsel %vm469, %v1268, 0.0
    %v1326 = vsel %vm45, %v1322, 0.0
    %v1327 = vsel %vm45, %v1323, 0.0
    %v1328 = vadd.f32 %v1326, %v1327
    %v1329 = vsel %vm45, %v1324, 0.0
    %v1330 = vadd.f32 %v1328, %v1329
    %v1331 = vsel %vm45, %v1325, 0.0
    %v1332 = vadd.f32 %v1330, %v1331
    %1333 = vadd.xlane.f32.xlu0 %v1332
    %v1334 = vpop.xlane.xlu0 %1333
    %v1335 = vrot.slane %v1334, 4
    %v1336 = vadd.f32 %v1334, %v1335
    %v1337 = vrot.slane %v1336, 2
    %v1338 = vadd.f32 %v1336, %v1337
    %v1339 = vrot.slane %v1338, 1
    %v1340 = vadd.f32 %v1338, %v1339
    %s1341 = vtos %v1340
    %v1342 = vstv %s1341
    %v1343 = vmul.f32 %v1342, 10.0
    %v1344 = vsub.f32 %v1321, %v1343
    %v1345 = vmul.f32 %v1344, 0.03125
    %v1346 = vadd.f32 %v1054, %v1345
    %v1347 = vld [vmem:[#allocation2 + $0x1c] sm:$0xff]
    %v1348 = vld [vmem:[#allocation3 + $0x1c] sm:$0xff]
    %v1349 = vld [vmem:[#allocation2 + $0x1b] sm:$0xff]
    %v1350 = vld [vmem:[#allocation3 + $0x1b] sm:$0xff]
    %v1351 = vmul.f32 %v1347, %v1347
    %v1352 = vmul.f32 %v1348, %v1348
    %v1353 = vmul.f32 %v1349, %v1349
    %v1354 = vmul.f32 %v1350, %v1350
    %v1355 = vsel %vm45, %v1351, 0.0
    %1356 = vadd.xlane.f32.xlu0 %v1355
    %v1357 = vpop.xlane.xlu0 %1356
    %v1358 = vsel %vm45, %v1352, 0.0
    %1359 = vadd.xlane.f32.xlu0 %v1358
    %v1360 = vpop.xlane.xlu0 %1359
    %v1361 = vsel %vm45, %v1353, 0.0
    %1362 = vadd.xlane.f32.xlu0 %v1361
    %v1363 = vpop.xlane.xlu0 %1362
    %v1364 = vsel %vm45, %v1354, 0.0
    %1365 = vadd.xlane.f32.xlu0 %v1364
    %v1366 = vpop.xlane.xlu0 %1365
    %v1367 = vrsqrt.pop %v1357
    %v1368 = vmul.f32 %v1367, %v1357
    %v1369 = vmul.f32 %v1368, %v1367
    %v1370 = vmul.f32 0.5, %v1369
    %v1371 = vsub.f32 1.5, %v1370
    %v1372 = vmul.f32 %v1367, %v1371
    %v1373 = vmul.f32 %v1357, %v1372
    %vm1374 = vcmp.eq.f32.partialorder %v1357, inf
    %v1375 = vsel %vm1374, %v1357, %v1373
    %vm1376 = vcmp.eq.f32.partialorder %v1357, 0.0
    %v1377 = vand.u32 %v1357, 2147483648
    %v1378 = vsel %vm1376, %v1377, %v1375
    %v1379 = vrsqrt.pop %v1360
    %v1380 = vmul.f32 %v1379, %v1360
    %v1381 = vmul.f32 %v1380, %v1379
    %v1382 = vmul.f32 0.5, %v1381
    %v1383 = vsub.f32 1.5, %v1382
    %v1384 = vmul.f32 %v1379, %v1383
    %v1385 = vmul.f32 %v1360, %v1384
    %vm1386 = vcmp.eq.f32.partialorder %v1360, inf
    %v1387 = vsel %vm1386, %v1360, %v1385
    %vm1388 = vcmp.eq.f32.partialorder %v1360, 0.0
    %v1389 = vand.u32 %v1360, 2147483648
    %v1390 = vsel %vm1388, %v1389, %v1387
    %v1391 = vrsqrt.pop %v1363
    %v1392 = vmul.f32 %v1391, %v1363
    %v1393 = vmul.f32 %v1392, %v1391
    %v1394 = vmul.f32 0.5, %v1393
    %v1395 = vsub.f32 1.5, %v1394
    %v1396 = vmul.f32 %v1391, %v1395
    %v1397 = vmul.f32 %v1363, %v1396
    %vm1398 = vcmp.eq.f32.partialorder %v1363, inf
    %v1399 = vsel %vm1398, %v1363, %v1397
    %vm1400 = vcmp.eq.f32.partialorder %v1363, 0.0
    %v1401 = vand.u32 %v1363, 2147483648
    %v1402 = vsel %vm1400, %v1401, %v1399
    %v1403 = vrsqrt.pop %v1366
    %v1404 = vmul.f32 %v1403, %v1366
    %v1405 = vmul.f32 %v1404, %v1403
    %v1406 = vmul.f32 0.5, %v1405
    %v1407 = vsub.f32 1.5, %v1406
    %v1408 = vmul.f32 %v1403, %v1407
    %v1409 = vmul.f32 %v1366, %v1408
    %vm1410 = vcmp.eq.f32.partialorder %v1366, inf
    %v1411 = vsel %vm1410, %v1366, %v1409
    %vm1412 = vcmp.eq.f32.partialorder %v1366, 0.0
    %v1413 = vand.u32 %v1366, 2147483648
    %v1414 = vsel %vm1412, %v1413, %v1411
    %v1416 = vsel %vm45, %v1347, 0
    %v1419 = vsel %vm45, %v1348, 0
    %v1422 = vsel %vm45, %v1349, 0
    %v1425 = vsel %vm45, %v1350, 0
    %1427 = vmatpush.xpose.msra.mxu0 0.0
    %1428 = vmatpush.xpose.msra.mxu0 0.0
    %1429 = vmatpush.xpose.msra.mxu0 0.0
    %1430 = vmatpush.xpose.msra.mxu0 0.0
    %1431 = vmatpush.xpose.msra.mxu0 0.0
    %1432 = vmatpush.xpose.msra.mxu0 0.0
    %1433 = vmatpush.xpose.msra.mxu0 0.0
    %1434 = vmatpush.xpose.msra.mxu0 0.0
    %1435 = vmatpush.xpose.msra.mxu0 0.0
    %1436 = vmatpush.xpose.msra.mxu0 0.0
    %1437 = vmatpush.xpose.msra.mxu0 0.0
    %1438 = vmatpush.xpose.msra.mxu0 0.0
    %1439 = vmatpush.xpose.msra.mxu0 %v1425
    %1440 = vmatpush.xpose.msra.mxu0 %v1422
    %1441 = vmatpush.xpose.msra.mxu0 %v1419
    %1442 = vmatpush.xpose.msra.mxu0 %v1416
    %1443 = vmatmul.f32.gmra.mxu0 %v1416
    %v1444 = vpop.f32.mrf.mxu0
    %v1445 = vadd.f32 0.0, %v1444
    %1446 = vmatmul.f32.gmra.mxu0 %v1419
    %v1447 = vpop.f32.mrf.mxu0
    %v1448 = vadd.f32 0.0, %v1447
    %1449 = vmatmul.f32.gmra.mxu0 %v1422
    %v1450 = vpop.f32.mrf.mxu0
    %v1451 = vadd.f32 0.0, %v1450
    %1452 = vmatmul.f32.gmra.mxu0 %v1425
    %v1453 = vpop.f32.mrf.mxu0
    %v1454 = vadd.f32 0.0, %v1453
    %1455 = vdwg.mxu0
    %v1457 = vsel %vm579, %v1378, 0
    %v1460 = vsel %vm579, %v1390, 0
    %v1463 = vsel %vm579, %v1402, 0
    %v1466 = vsel %vm579, %v1414, 0
    %1468 = vmatpush.xpose.msra.mxu0 0.0
    %1469 = vmatpush.xpose.msra.mxu0 0.0
    %1470 = vmatpush.xpose.msra.mxu0 0.0
    %1471 = vmatpush.xpose.msra.mxu0 0.0
    %1472 = vmatpush.xpose.msra.mxu0 0.0
    %1473 = vmatpush.xpose.msra.mxu0 0.0
    %1474 = vmatpush.xpose.msra.mxu0 0.0
    %1475 = vmatpush.xpose.msra.mxu0 0.0
    %1476 = vmatpush.xpose.msra.mxu0 0.0
    %1477 = vmatpush.xpose.msra.mxu0 0.0
    %1478 = vmatpush.xpose.msra.mxu0 0.0
    %1479 = vmatpush.xpose.msra.mxu0 0.0
    %1480 = vmatpush.xpose.msra.mxu0 %v1466
    %1481 = vmatpush.xpose.msra.mxu0 %v1463
    %1482 = vmatpush.xpose.msra.mxu0 %v1460
    %1483 = vmatpush.xpose.msra.mxu0 %v1457
    %1484 = vmatmul.f32.gmra.mxu0 %v1457
    %v1485 = vpop.f32.mrf.mxu0
    %v1486 = vadd.f32 0.0, %v1485
    %1487 = vmatmul.f32.gmra.mxu0 %v1460
    %v1488 = vpop.f32.mrf.mxu0
    %v1489 = vadd.f32 0.0, %v1488
    %1490 = vmatmul.f32.gmra.mxu0 %v1463
    %v1491 = vpop.f32.mrf.mxu0
    %v1492 = vadd.f32 0.0, %v1491
    %1493 = vmatmul.f32.gmra.mxu0 %v1466
    %v1494 = vpop.f32.mrf.mxu0
    %v1495 = vadd.f32 0.0, %v1494
    %1496 = vdwg.mxu0
    %v1497 = vmax.f32 %v1486, 1e-08
    %v1498 = vmax.f32 %v1489, 1e-08
    %v1499 = vmax.f32 %v1492, 1e-08
    %v1500 = vmax.f32 %v1495, 1e-08
    %v1501 = vrcp.pop %v1497
    %v1502 = vmul.f32 %v1497, %v1501
    %v1503 = vsub.f32 1.0, %v1502
    %v1504 = vmul.f32 %v1501, %v1503
    %v1505 = vadd.f32 %v1501, %v1504
    %vm1506 = vweird.f32 %v1497
    %vm1507 = vweird.f32 %v1501
    %vm1508 = vmor %vm1506, %vm1507
    %v1509 = vsel %vm1508, %v1501, %v1505
    %v1510 = vand.u32 2147483647, %v1497
    %vm1511 = vcmp.eq.f32.partialorder %v1510, 8.507059e+37
    %v1512 = vand.u32 %v1497, 2147483648
    %v1513 = vor.u32 1.1754944e-38, %v1512
    %v1514 = vsel %vm1511, %v1513, %v1509
    %v1515 = vrcp.pop %v1498
    %v1516 = vmul.f32 %v1498, %v1515
    %v1517 = vsub.f32 1.0, %v1516
    %v1518 = vmul.f32 %v1515, %v1517
    %v1519 = vadd.f32 %v1515, %v1518
    %vm1520 = vweird.f32 %v1498
    %vm1521 = vweird.f32 %v1515
    %vm1522 = vmor %vm1520, %vm1521
    %v1523 = vsel %vm1522, %v1515, %v1519
    %v1524 = vand.u32 2147483647, %v1498
    %vm1525 = vcmp.eq.f32.partialorder %v1524, 8.507059e+37
    %v1526 = vand.u32 %v1498, 2147483648
    %v1527 = vor.u32 1.1754944e-38, %v1526
    %v1528 = vsel %vm1525, %v1527, %v1523
    %v1529 = vrcp.pop %v1499
    %v1530 = vmul.f32 %v1499, %v1529
    %v1531 = vsub.f32 1.0, %v1530
    %v1532 = vmul.f32 %v1529, %v1531
    %v1533 = vadd.f32 %v1529, %v1532
    %vm1534 = vweird.f32 %v1499
    %vm1535 = vweird.f32 %v1529
    %vm1536 = vmor %vm1534, %vm1535
    %v1537 = vsel %vm1536, %v1529, %v1533
    %v1538 = vand.u32 2147483647, %v1499
    %vm1539 = vcmp.eq.f32.partialorder %v1538, 8.507059e+37
    %v1540 = vand.u32 %v1499, 2147483648
    %v1541 = vor.u32 1.1754944e-38, %v1540
    %v1542 = vsel %vm1539, %v1541, %v1537
    %v1543 = vrcp.pop %v1500
    %v1544 = vmul.f32 %v1500, %v1543
    %v1545 = vsub.f32 1.0, %v1544
    %v1546 = vmul.f32 %v1543, %v1545
    %v1547 = vadd.f32 %v1543, %v1546
    %vm1548 = vweird.f32 %v1500
    %vm1549 = vweird.f32 %v1543
    %vm1550 = vmor %vm1548, %vm1549
    %v1551 = vsel %vm1550, %v1543, %v1547
    %v1552 = vand.u32 2147483647, %v1500
    %vm1553 = vcmp.eq.f32.partialorder %v1552, 8.507059e+37
    %v1554 = vand.u32 %v1500, 2147483648
    %v1555 = vor.u32 1.1754944e-38, %v1554
    %v1556 = vsel %vm1553, %v1555, %v1551
    %v1557 = vmul.f32 %v1445, %v1514
    %v1558 = vmul.f32 %v1448, %v1528
    %v1559 = vmul.f32 %v1451, %v1542
    %v1560 = vmul.f32 %v1454, %v1556
    %v1561 = vmul.f32 %v1557, 10.0
    %v1562 = vmul.f32 %v1558, 10.0
    %v1563 = vmul.f32 %v1559, 10.0
    %v1564 = vmul.f32 %v1560, 10.0
    %v1565 = vmul.f32 %v1561, 1.442695
    %v1566 = vpow.pop %v1565
    %v1567 = vmul.f32 %v1562, 1.442695
    %v1568 = vpow.pop %v1567
    %v1569 = vmul.f32 %v1563, 1.442695
    %v1570 = vpow.pop %v1569
    %v1571 = vmul.f32 %v1564, 1.442695
    %v1572 = vpow.pop %v1571
    %v1573 = vsel %vm450, 0.0, %v1566
    %v1574 = vsel %vm451, 0.0, %v1568
    %v1575 = vsel %vm452, 0.0, %v1570
    %v1576 = vsel %vm453, 0.0, %v1572
    %v1577 = vsel %vm45, %v1573, 0.0
    %1578 = vadd.xlane.f32.xlu0 %v1577
    %v1579 = vpop.xlane.xlu0 %1578
    %v1580 = vsel %vm45, %v1574, 0.0
    %1581 = vadd.xlane.f32.xlu0 %v1580
    %v1582 = vpop.xlane.xlu0 %1581
    %v1583 = vsel %vm45, %v1575, 0.0
    %1584 = vadd.xlane.f32.xlu0 %v1583
    %v1585 = vpop.xlane.xlu0 %1584
    %v1586 = vsel %vm45, %v1576, 0.0
    %1587 = vadd.xlane.f32.xlu0 %v1586
    %v1588 = vpop.xlane.xlu0 %1587
    %v1589 = vlog2.pop %v1579
    %v1590 = vmul.f32 %v1589, 0.6931472
    %v1591 = vlog2.pop %v1582
    %v1592 = vmul.f32 %v1591, 0.6931472
    %v1593 = vlog2.pop %v1585
    %v1594 = vmul.f32 %v1593, 0.6931472
    %v1595 = vlog2.pop %v1588
    %v1596 = vmul.f32 %v1595, 0.6931472
    %v1597 = vsel %vm579, %v1590, 0.0
    %v1598 = vsel %vm579, %v1592, 0.0
    %v1599 = vadd.f32 %v1597, %v1598
    %v1600 = vsel %vm579, %v1594, 0.0
    %v1601 = vadd.f32 %v1599, %v1600
    %v1602 = vsel %vm579, %v1596, 0.0
    %v1603 = vadd.f32 %v1601, %v1602
    %1604 = vadd.xlane.f32.xlu0 %v1603
    %v1605 = vpop.xlane.xlu0 %1604
    %v1606 = vrot.slane %v1605, 4
    %v1607 = vadd.f32 %v1605, %v1606
    %v1608 = vrot.slane %v1607, 2
    %v1609 = vadd.f32 %v1607, %v1608
    %v1610 = vrot.slane %v1609, 1
    %v1611 = vadd.f32 %v1609, %v1610
    %s1612 = vtos %v1611
    %v1613 = vstv %s1612
    %v1614 = vsel %vm466, %v1557, 0.0
    %v1615 = vsel %vm467, %v1558, 0.0
    %v1616 = vsel %vm468, %v1559, 0.0
    %v1617 = vsel %vm469, %v1560, 0.0
    %v1618 = vsel %vm45, %v1614, 0.0
    %v1619 = vsel %vm45, %v1615, 0.0
    %v1620 = vadd.f32 %v1618, %v1619
    %v1621 = vsel %vm45, %v1616, 0.0
    %v1622 = vadd.f32 %v1620, %v1621
    %v1623 = vsel %vm45, %v1617, 0.0
    %v1624 = vadd.f32 %v1622, %v1623
    %1625 = vadd.xlane.f32.xlu0 %v1624
    %v1626 = vpop.xlane.xlu0 %1625
    %v1627 = vrot.slane %v1626, 4
    %v1628 = vadd.f32 %v1626, %v1627
    %v1629 = vrot.slane %v1628, 2
    %v1630 = vadd.f32 %v1628, %v1629
    %v1631 = vrot.slane %v1630, 1
    %v1632 = vadd.f32 %v1630, %v1631
    %s1633 = vtos %v1632
    %v1634 = vstv %s1633
    %v1635 = vmul.f32 %v1634, 10.0
    %v1636 = vsub.f32 %v1613, %v1635
    %v1637 = vmul.f32 %v1636, 0.03125
    %v1638 = vadd.f32 %v1346, %v1637
    %vm1639 = vcmask 0
    %1640 = vst.msk [vmem:[#allocation4] sm:$0x1] %vm1639, %v1638
    // Predicated region
    $region26: #{cl_mlp_forward.1} parent=1 // pred_check
      _
    $region27: #{cl_mlp_forward.1} parent=1 // pred_check_branch
      %1642 = sbr.rel (0) target = $region29
    $region28: #{cl_mlp_forward.1} parent=1 // pred_region
      _
    $region29: #{cl_mlp_forward.1} parent=1 // pred_fallthru
      _
    // Predicated region
    $region30: #{cl_mlp_forward.1} parent=1 // pred_check
      _
    $region31: #{cl_mlp_forward.1} parent=1 // pred_check_branch
      %1644 = sbr.rel (0) target = $region33
    $region32: #{cl_mlp_forward.1} parent=1 // pred_region
      _
    $region33: #{cl_mlp_forward.1} parent=1 // pred_fallthru
      _
    // Predicated region
    $region34: #{cl_mlp_forward.1} parent=1 // pred_check
      _
    $region35: #{cl_mlp_forward.1} parent=1 // pred_check_branch
      %1646 = sbr.rel (0) target = $region37
    $region36: #{cl_mlp_forward.1} parent=1 // pred_region
      %1648 = vsyncadd [#allocation5], 0
      %s1650 = sshll.u32 [#allocation4], 4
      %s1651 = int_to_ptr.vmem [resolvable:$true] %s1650
      %s1652 = sshll.u32 %s8, 4
      %s1653 = int_to_ptr.hbm [resolvable:$true] %s1652
      %1655 = dma.vmem_to_hbm [thread:$0]  %s1651, 16, %s1653, [#allocation5]
    $region37: #{cl_mlp_forward.1} parent=1 // pred_fallthru
      _
    // Predicated region
    $region38: #{cl_mlp_forward.1} parent=1 // pred_check
      _
    $region39: #{cl_mlp_forward.1} parent=1 // pred_check_branch
      %1657 = sbr.rel (0) target = $region41
    $region40: #{cl_mlp_forward.1} parent=1 // pred_region
      _
    $region41: #{cl_mlp_forward.1} parent=1 // pred_fallthru
      _
    // Predicated region
    $region42: #{cl_mlp_forward.1} parent=1 // pred_check
      _
    $region43: #{cl_mlp_forward.1} parent=1 // pred_check_branch
      %1659 = sbr.rel (0) target = $region45
    $region44: #{cl_mlp_forward.1} parent=1 // pred_region
      _
    $region45: #{cl_mlp_forward.1} parent=1 // pred_fallthru
      _
    // Predicated region
    $region46: #{cl_mlp_forward.1} parent=1 // pred_check
      _
    $region47: #{cl_mlp_forward.1} parent=1 // pred_check_branch
      %1661 = sbr.rel (0) target = $region49
    $region48: #{cl_mlp_forward.1} parent=1 // pred_region
      %1663 = dma.done [#allocation5], 16
    $region49: #{cl_mlp_forward.1} parent=1 // pred_fallthru
      _
    %1664 = vsyncpa [#allocation5], 1

</llo_original>
